<compile_context>
chip_gen: v7x
topology: tpu7x:2x2x1
jax: 0.10.0
libtpu: 0.0.40
codegen_flags: <defaults>
</compile_context>

<pallas_src>
import functools

import jax
import jax.numpy as jnp
from jax import lax
from jax.experimental import pallas as pl
from jax.experimental.pallas import tpu as pltpu


# ---------------------------------------------------------------------------
# Fused kernel: gather -> biRNN -> attention -> mean-pool -> fc
# ---------------------------------------------------------------------------
def _fused_kernel(ids_ref,                    # SMEM [B*T] int32 (row = b*T + t)
                  emb_ref,                    # [V, E]
                  wih_ref,                    # [E, 2H]  (fwd | bwd input proj)
                  whh_ref,                    # [2H, 2H] block-diag(whh_f, whh_b)
                  b_ref,                      # [1, 2H]  (b_ih + b_hh, fwd | bwd)
                  wqkv_ref, bqkv_ref,         # [D, 3D], [1, 3D]
                  wfc_ref, bfc_ref,           # [D, Cpad], [1, Cpad]
                  out_ref,                    # [Bt, Cpad]
                  qkv_ref,                    # VMEM scratch [T*Bt, 3D]
                  *, seq_len, batch_tile, hidden, scale):
    T, Bt, H = seq_len, batch_tile, hidden
    D = 2 * H
    V = emb_ref.shape[0]
    base = pl.program_id(0) * (Bt * T)

    # ---- Embedding gather via one-hot matmul (time-major within the tile) --
    iota_v = lax.broadcasted_iota(jnp.int32, (1, V), 1)        # hoisted
    onehot_rows = []
    for t in range(T):                                         # static, tiny
        for bb in range(Bt):
            tok = ids_ref[base + bb * T + t]                   # SMEM scalar read
            onehot_rows.append((iota_v == tok).astype(jnp.float32))
    onehot = jnp.concatenate(onehot_rows, axis=0)              # [T*Bt, V]
    x = jnp.dot(onehot, emb_ref[...],
                preferred_element_type=jnp.float32)            # [T*Bt, E]

    # ---- Input projection for BOTH directions in one matmul ----------------
    g = jnp.dot(x, wih_ref[...],
                preferred_element_type=jnp.float32) + b_ref[...]   # [T*Bt, 2H]

    whh = whh_ref[...]                                         # hoisted weights

    # ---- Fused bidirectional recurrence: state [Bt, 2H], one matmul/step ---
    h = jnp.zeros((Bt, D), jnp.float32)
    hf = [None] * T
    hb = [None] * T
    for i in range(T):                                         # fully unrolled
        tb = T - 1 - i
        gstep = jnp.concatenate(
            [g[i * Bt:(i + 1) * Bt, :H],                       # fwd gates @ t=i
             g[tb * Bt:(tb + 1) * Bt, H:]], axis=-1)           # bwd gates @ t=tb
        h = jnp.tanh(gstep + jnp.dot(h, whh,
                                     preferred_element_type=jnp.float32))
        hf[i] = h[:, :H]
        hb[tb] = h[:, H:]

    # Encoder output, time-major within the tile; stays in vregs.
    enc = jnp.concatenate(
        [jnp.concatenate([hf[t], hb[t]], axis=-1) for t in range(T)], axis=0)

    # ---- Batched Q|K|V projection: one matmul over the whole slab ----------
    qkv_ref[...] = (jnp.dot(enc, wqkv_ref[...],
                            preferred_element_type=jnp.float32) + bqkv_ref[...])

    # ---- Per-sequence attention + mean-pool (scores are only [T, T]) -------
    inv_t = 1.0 / T
    pooled_rows = []
    for bb in range(Bt):                                       # static batch loop
        qkv_b = qkv_ref[pl.ds(bb, T, stride=Bt), :]            # [T, 3D] strided
        q = qkv_b[:, :D]
        k = qkv_b[:, D:2 * D]
        v = qkv_b[:, 2 * D:]
        # Q @ K^T without materializing a transpose.
        scores = lax.dot_general(q, k, (((1,), (1,)), ((), ())),
                                 preferred_element_type=jnp.float32) * scale
        m = jnp.max(scores, axis=-1, keepdims=True)
        e = jnp.exp(scores - m)
        w = e * pl.reciprocal(jnp.sum(e, axis=-1, keepdims=True), approx=True)
        ctx = jnp.dot(w, v, preferred_element_type=jnp.float32)   # [T, D]
        pooled_rows.append(jnp.sum(ctx, axis=0, keepdims=True) * inv_t)
    pooled = jnp.concatenate(pooled_rows, axis=0)              # [Bt, D]

    # ---- Final classifier: one lane-dense matmul for the tile --------------
    out_ref[...] = (jnp.dot(pooled, wfc_ref[...],
                            preferred_element_type=jnp.float32) + bfc_ref[...])


# ---------------------------------------------------------------------------
# Wrapper
# ---------------------------------------------------------------------------
def sentiment_classifier_forward(token_ids, packed, *, batch_tile=None):
    B, T = token_ids.shape
    if batch_tile is None:
        batch_tile = B                      # whole batch per step at toy sizes
    assert B % batch_tile == 0
    V, E = packed["embedding"].shape
    D = packed["whh_bd"].shape[0]
    H = D // 2
    c_pad = packed["wfc_p"].shape[1]
    C = packed["num_classes"]

    ids_flat = token_ids.reshape(-1).astype(jnp.int32)         # [B*T], row=b*T+t

    kernel = functools.partial(_fused_kernel, seq_len=T, batch_tile=batch_tile,
                               hidden=H, scale=float(D) ** -0.5)
    cmap = lambda i, ids: (0, 0)                               # grid-invariant
    grid_spec = pltpu.PrefetchScalarGridSpec(
        num_scalar_prefetch=1,
        grid=(B // batch_tile,),
        in_specs=[
            pl.BlockSpec((V, E), cmap),
            pl.BlockSpec((E, 2 * H), cmap),
            pl.BlockSpec((2 * H, 2 * H), cmap),
            pl.BlockSpec((1, 2 * H), cmap),
            pl.BlockSpec((D, 3 * D), cmap),
            pl.BlockSpec((1, 3 * D), cmap),
            pl.BlockSpec((D, c_pad), cmap),
            pl.BlockSpec((1, c_pad), cmap),
        ],
        out_specs=pl.BlockSpec((batch_tile, c_pad), lambda i, ids: (i, 0)),
        scratch_shapes=[pltpu.VMEM((T * batch_tile, 3 * D), jnp.float32)],
    )
    out = pl.pallas_call(
        kernel,
        out_shape=jax.ShapeDtypeStruct((B, c_pad), jnp.float32),
        grid_spec=grid_spec,
        compiler_params=pltpu.CompilerParams(
            dimension_semantics=("parallel",),
            vmem_limit_bytes=32 * 1024 * 1024,
        ),
    )(ids_flat, packed["embedding"], packed["wih"], packed["whh_bd"],
      packed["b"], packed["wqkv"], packed["bqkv"],
      packed["wfc_p"], packed["bfc_p"])
    return out[:, :C]                                          # [B, C]


# ---------------------------------------------------------------------------
# Parameters
# ---------------------------------------------------------------------------
def init_params(key, vocab_size, embed_dim, hidden_dim, num_classes):
    ks = jax.random.split(key, 16)
    s = 0.1
    D = 2 * hidden_dim
    emb = jax.random.normal(ks[0], (vocab_size, embed_dim), jnp.float32) * s
    emb = emb.at[0].set(0.0)                                   # padding_idx=0
    n = lambda k, shape: jax.random.normal(k, shape, jnp.float32) * s
    return {
        "embedding": emb,
        # RNN weights stored pre-transposed: h = tanh(x @ wih + h @ whh + b)
        "wih_f": n(ks[1], (embed_dim, hidden_dim)),
        "whh_f": n(ks[2], (hidden_dim, hidden_dim)),
        "b_f":   n(ks[3], (1, hidden_dim)),          # b_ih + b_hh combined
        "wih_b": n(ks[4], (embed_dim, hidden_dim)),
        "whh_b": n(ks[5], (hidden_dim, hidden_dim)),
        "b_b":   n(ks[6], (1, hidden_dim)),
        # attention (weights pre-transposed so x @ W)
        "wq": n(ks[7], (D, D)),  "bq": n(ks[8], (1, D)),
        "wk": n(ks[9], (D, D)),  "bk": n(ks[10], (1, D)),
        "wv": n(ks[11], (D, D)), "bv": n(ks[12], (1, D)),
        # final classifier
        "wfc": n(ks[13], (D, num_classes)),
        "bfc": n(ks[14], (1, num_classes)),
    }


def pack_params(params, num_classes):
    """One-time layout packing (concat / block-diag / pad) hoisted out of the
    per-call path."""
    H = params["whh_f"].shape[0]
    D = 2 * H
    c_pad = ((num_classes + 127) // 128) * 128                 # lane-dense logits
    whh_bd = jnp.zeros((D, D), jnp.float32)
    whh_bd = whh_bd.at[:H, :H].set(params["whh_f"])
    whh_bd = whh_bd.at[H:, H:].set(params["whh_b"])
    return {
        "embedding": params["embedding"],
        "wih": jnp.concatenate([params["wih_f"], params["wih_b"]], axis=1),
        "whh_bd": whh_bd,
        "b": jnp.concatenate([params["b_f"], params["b_b"]], axis=1),
        "wqkv": jnp.concatenate([params["wq"], params["wk"], params["wv"]],
                                axis=1),
        "bqkv": jnp.concatenate([params["bq"], params["bk"], params["bv"]],
                                axis=1),
        "wfc_p": jnp.pad(params["wfc"], ((0, 0), (0, c_pad - num_classes))),
        "bfc_p": jnp.pad(params["bfc"], ((0, 0), (0, c_pad - num_classes))),
        "num_classes": num_classes,
    }


# ---------------------------------------------------------------------------
# Pure-JAX reference (mirrors the PyTorch module in eval mode)
# ---------------------------------------------------------------------------
def reference_forward(token_ids, params):
    B, T = token_ids.shape
    H = params["whh_f"].shape[0]
    D = 2 * H
    emb = params["embedding"][token_ids]                       # [B, T, E]

    def run_dir(x, wih, whh, b, reverse):
        order = range(T - 1, -1, -1) if reverse else range(T)
        h = jnp.zeros((B, H), jnp.float32)
        outs = [None] * T
        for t in order:
            h = jnp.tanh(x[:, t] @ wih + h @ whh + b)
            outs[t] = h
        return jnp.stack(outs, axis=1)                         # [B, T, H]

    of = run_dir(emb, params["wih_f"], params["whh_f"], params["b_f"][0], False)
    ob = run_dir(emb, params["wih_b"], params["whh_b"], params["b_b"][0], True)
    enc = jnp.concatenate([of, ob], axis=-1)                   # [B, T, D]

    q = enc @ params["wq"] + params["bq"][0]
    k = enc @ params["wk"] + params["bk"][0]
    v = enc @ params["wv"] + params["bv"][0]
    scores = jnp.einsum("btd,bsd->bts", q, k) * (float(D) ** -0.5)
    w = jax.nn.softmax(scores, axis=-1)
    ctx = jnp.einsum("bts,bsd->btd", w, v)
    pooled = ctx.mean(axis=1)                                  # dropout = identity
    return pooled @ params["wfc"] + params["bfc"][0]


if __name__ == "__main__":
    VOCAB, EMBED, HIDDEN, NUM_CLASSES = 50, 16, 16, 3
    B, T = 2, 8

    root = jax.random.PRNGKey(0)
    k_tok, k_par = jax.random.split(root)
    token_ids = jax.random.randint(k_tok, (B, T), 0, VOCAB, dtype=jnp.int32)
    params = init_params(k_par, VOCAB, EMBED, HIDDEN, NUM_CLASSES)
    packed = pack_params(params, NUM_CLASSES)

    logits = sentiment_classifier_forward(token_ids, packed)
    logits = jax.block_until_ready(logits)
    assert logits.shape == (B, NUM_CLASSES)

    ref = reference_forward(token_ids, params)
    assert jnp.allclose(logits, ref, atol=2e-3, rtol=2e-3), (logits, ref)
    print("KERNEL_OK")
</pallas_src>

<mosaic_0001>
module attributes {stable_mosaic.version = 11 : i64} {
  func.func @_fused_kernel(%arg0: i32, %arg1: memref<16xi32, #tpu.memory_space<smem>>, %arg2: memref<50x16xf32, #tpu.memory_space<vmem>>, %arg3: memref<16x32xf32, #tpu.memory_space<vmem>>, %arg4: memref<32x32xf32, #tpu.memory_space<vmem>>, %arg5: memref<1x32xf32, #tpu.memory_space<vmem>>, %arg6: memref<32x96xf32, #tpu.memory_space<vmem>>, %arg7: memref<1x96xf32, #tpu.memory_space<vmem>>, %arg8: memref<32x128xf32, #tpu.memory_space<vmem>>, %arg9: memref<1x128xf32, #tpu.memory_space<vmem>>, %arg10: memref<2x128xf32, #tpu.memory_space<vmem>>, %arg11: memref<16x96xf32, #tpu.memory_space<vmem>>) attributes {dimension_semantics = [#tpu.dimension_semantics<parallel>], iteration_bounds = array<i64: 1>, scalar_prefetch = 1 : i64, scratch_operands = 1 : i64, tpu.core_type = #tpu.core_type<tc>, window_params = [{pipeline_mode = #tpu.pipeline_mode<synchronous>, transform_indices = @transform_0, window_bounds = array<i64: 50, 16>}, {pipeline_mode = #tpu.pipeline_mode<synchronous>, transform_indices = @transform_1, window_bounds = array<i64: 16, 32>}, {pipeline_mode = #tpu.pipeline_mode<synchronous>, transform_indices = @transform_2, window_bounds = array<i64: 32, 32>}, {pipeline_mode = #tpu.pipeline_mode<synchronous>, transform_indices = @transform_3, window_bounds = array<i64: 1, 32>}, {pipeline_mode = #tpu.pipeline_mode<synchronous>, transform_indices = @transform_4, window_bounds = array<i64: 32, 96>}, {pipeline_mode = #tpu.pipeline_mode<synchronous>, transform_indices = @transform_5, window_bounds = array<i64: 1, 96>}, {pipeline_mode = #tpu.pipeline_mode<synchronous>, transform_indices = @transform_6, window_bounds = array<i64: 32, 128>}, {pipeline_mode = #tpu.pipeline_mode<synchronous>, transform_indices = @transform_7, window_bounds = array<i64: 1, 128>}, {transform_indices = @transform_8, window_bounds = array<i64: 2, 128>}]} {
    %c16_i32 = arith.constant 16 : i32
    %0 = arith.muli %arg0, %c16_i32 : i32
    %1 = tpu.iota {dimensions = array<i32: 1>} : vector<1x50xi32>
    %c0_i32 = arith.constant 0 : i32
    %2 = arith.addi %0, %c0_i32 : i32
    %c0_i32_0 = arith.constant 0 : i32
    %3 = arith.addi %2, %c0_i32_0 : i32
    %4 = arith.index_cast %3 : i32 to index
    %5 = memref.load %arg1[%4] : memref<16xi32, #tpu.memory_space<smem>>
    %6 = vector.broadcast %5 : i32 to vector<1x50xi32>
    %7 = arith.cmpi eq, %1, %6 : vector<1x50xi32>
    %8 = arith.extui %7 : vector<1x50xi1> to vector<1x50xi32>
    %9 = arith.sitofp %8 : vector<1x50xi32> to vector<1x50xf32>
    %c8_i32 = arith.constant 8 : i32
    %10 = arith.addi %0, %c8_i32 : i32
    %c0_i32_1 = arith.constant 0 : i32
    %11 = arith.addi %10, %c0_i32_1 : i32
    %12 = arith.index_cast %11 : i32 to index
    %13 = memref.load %arg1[%12] : memref<16xi32, #tpu.memory_space<smem>>
    %14 = vector.broadcast %13 : i32 to vector<1x50xi32>
    %15 = arith.cmpi eq, %1, %14 : vector<1x50xi32>
    %16 = arith.extui %15 : vector<1x50xi1> to vector<1x50xi32>
    %17 = arith.sitofp %16 : vector<1x50xi32> to vector<1x50xf32>
    %c0_i32_2 = arith.constant 0 : i32
    %18 = arith.addi %0, %c0_i32_2 : i32
    %c1_i32 = arith.constant 1 : i32
    %19 = arith.addi %18, %c1_i32 : i32
    %20 = arith.index_cast %19 : i32 to index
    %21 = memref.load %arg1[%20] : memref<16xi32, #tpu.memory_space<smem>>
    %22 = vector.broadcast %21 : i32 to vector<1x50xi32>
    %23 = arith.cmpi eq, %1, %22 : vector<1x50xi32>
    %24 = arith.extui %23 : vector<1x50xi1> to vector<1x50xi32>
    %25 = arith.sitofp %24 : vector<1x50xi32> to vector<1x50xf32>
    %c8_i32_3 = arith.constant 8 : i32
    %26 = arith.addi %0, %c8_i32_3 : i32
    %c1_i32_4 = arith.constant 1 : i32
    %27 = arith.addi %26, %c1_i32_4 : i32
    %28 = arith.index_cast %27 : i32 to index
    %29 = memref.load %arg1[%28] : memref<16xi32, #tpu.memory_space<smem>>
    %30 = vector.broadcast %29 : i32 to vector<1x50xi32>
    %31 = arith.cmpi eq, %1, %30 : vector<1x50xi32>
    %32 = arith.extui %31 : vector<1x50xi1> to vector<1x50xi32>
    %33 = arith.sitofp %32 : vector<1x50xi32> to vector<1x50xf32>
    %c0_i32_5 = arith.constant 0 : i32
    %34 = arith.addi %0, %c0_i32_5 : i32
    %c2_i32 = arith.constant 2 : i32
    %35 = arith.addi %34, %c2_i32 : i32
    %36 = arith.index_cast %35 : i32 to index
    %37 = memref.load %arg1[%36] : memref<16xi32, #tpu.memory_space<smem>>
    %38 = vector.broadcast %37 : i32 to vector<1x50xi32>
    %39 = arith.cmpi eq, %1, %38 : vector<1x50xi32>
    %40 = arith.extui %39 : vector<1x50xi1> to vector<1x50xi32>
    %41 = arith.sitofp %40 : vector<1x50xi32> to vector<1x50xf32>
    %c8_i32_6 = arith.constant 8 : i32
    %42 = arith.addi %0, %c8_i32_6 : i32
    %c2_i32_7 = arith.constant 2 : i32
    %43 = arith.addi %42, %c2_i32_7 : i32
    %44 = arith.index_cast %43 : i32 to index
    %45 = memref.load %arg1[%44] : memref<16xi32, #tpu.memory_space<smem>>
    %46 = vector.broadcast %45 : i32 to vector<1x50xi32>
    %47 = arith.cmpi eq, %1, %46 : vector<1x50xi32>
    %48 = arith.extui %47 : vector<1x50xi1> to vector<1x50xi32>
    %49 = arith.sitofp %48 : vector<1x50xi32> to vector<1x50xf32>
    %c0_i32_8 = arith.constant 0 : i32
    %50 = arith.addi %0, %c0_i32_8 : i32
    %c3_i32 = arith.constant 3 : i32
    %51 = arith.addi %50, %c3_i32 : i32
    %52 = arith.index_cast %51 : i32 to index
    %53 = memref.load %arg1[%52] : memref<16xi32, #tpu.memory_space<smem>>
    %54 = vector.broadcast %53 : i32 to vector<1x50xi32>
    %55 = arith.cmpi eq, %1, %54 : vector<1x50xi32>
    %56 = arith.extui %55 : vector<1x50xi1> to vector<1x50xi32>
    %57 = arith.sitofp %56 : vector<1x50xi32> to vector<1x50xf32>
    %c8_i32_9 = arith.constant 8 : i32
    %58 = arith.addi %0, %c8_i32_9 : i32
    %c3_i32_10 = arith.constant 3 : i32
    %59 = arith.addi %58, %c3_i32_10 : i32
    %60 = arith.index_cast %59 : i32 to index
    %61 = memref.load %arg1[%60] : memref<16xi32, #tpu.memory_space<smem>>
    %62 = vector.broadcast %61 : i32 to vector<1x50xi32>
    %63 = arith.cmpi eq, %1, %62 : vector<1x50xi32>
    %64 = arith.extui %63 : vector<1x50xi1> to vector<1x50xi32>
    %65 = arith.sitofp %64 : vector<1x50xi32> to vector<1x50xf32>
    %c0_i32_11 = arith.constant 0 : i32
    %66 = arith.addi %0, %c0_i32_11 : i32
    %c4_i32 = arith.constant 4 : i32
    %67 = arith.addi %66, %c4_i32 : i32
    %68 = arith.index_cast %67 : i32 to index
    %69 = memref.load %arg1[%68] : memref<16xi32, #tpu.memory_space<smem>>
    %70 = vector.broadcast %69 : i32 to vector<1x50xi32>
    %71 = arith.cmpi eq, %1, %70 : vector<1x50xi32>
    %72 = arith.extui %71 : vector<1x50xi1> to vector<1x50xi32>
    %73 = arith.sitofp %72 : vector<1x50xi32> to vector<1x50xf32>
    %c8_i32_12 = arith.constant 8 : i32
    %74 = arith.addi %0, %c8_i32_12 : i32
    %c4_i32_13 = arith.constant 4 : i32
    %75 = arith.addi %74, %c4_i32_13 : i32
    %76 = arith.index_cast %75 : i32 to index
    %77 = memref.load %arg1[%76] : memref<16xi32, #tpu.memory_space<smem>>
    %78 = vector.broadcast %77 : i32 to vector<1x50xi32>
    %79 = arith.cmpi eq, %1, %78 : vector<1x50xi32>
    %80 = arith.extui %79 : vector<1x50xi1> to vector<1x50xi32>
    %81 = arith.sitofp %80 : vector<1x50xi32> to vector<1x50xf32>
    %c0_i32_14 = arith.constant 0 : i32
    %82 = arith.addi %0, %c0_i32_14 : i32
    %c5_i32 = arith.constant 5 : i32
    %83 = arith.addi %82, %c5_i32 : i32
    %84 = arith.index_cast %83 : i32 to index
    %85 = memref.load %arg1[%84] : memref<16xi32, #tpu.memory_space<smem>>
    %86 = vector.broadcast %85 : i32 to vector<1x50xi32>
    %87 = arith.cmpi eq, %1, %86 : vector<1x50xi32>
    %88 = arith.extui %87 : vector<1x50xi1> to vector<1x50xi32>
    %89 = arith.sitofp %88 : vector<1x50xi32> to vector<1x50xf32>
    %c8_i32_15 = arith.constant 8 : i32
    %90 = arith.addi %0, %c8_i32_15 : i32
    %c5_i32_16 = arith.constant 5 : i32
    %91 = arith.addi %90, %c5_i32_16 : i32
    %92 = arith.index_cast %91 : i32 to index
    %93 = memref.load %arg1[%92] : memref<16xi32, #tpu.memory_space<smem>>
    %94 = vector.broadcast %93 : i32 to vector<1x50xi32>
    %95 = arith.cmpi eq, %1, %94 : vector<1x50xi32>
    %96 = arith.extui %95 : vector<1x50xi1> to vector<1x50xi32>
    %97 = arith.sitofp %96 : vector<1x50xi32> to vector<1x50xf32>
    %c0_i32_17 = arith.constant 0 : i32
    %98 = arith.addi %0, %c0_i32_17 : i32
    %c6_i32 = arith.constant 6 : i32
    %99 = arith.addi %98, %c6_i32 : i32
    %100 = arith.index_cast %99 : i32 to index
    %101 = memref.load %arg1[%100] : memref<16xi32, #tpu.memory_space<smem>>
    %102 = vector.broadcast %101 : i32 to vector<1x50xi32>
    %103 = arith.cmpi eq, %1, %102 : vector<1x50xi32>
    %104 = arith.extui %103 : vector<1x50xi1> to vector<1x50xi32>
    %105 = arith.sitofp %104 : vector<1x50xi32> to vector<1x50xf32>
    %c8_i32_18 = arith.constant 8 : i32
    %106 = arith.addi %0, %c8_i32_18 : i32
    %c6_i32_19 = arith.constant 6 : i32
    %107 = arith.addi %106, %c6_i32_19 : i32
    %108 = arith.index_cast %107 : i32 to index
    %109 = memref.load %arg1[%108] : memref<16xi32, #tpu.memory_space<smem>>
    %110 = vector.broadcast %109 : i32 to vector<1x50xi32>
    %111 = arith.cmpi eq, %1, %110 : vector<1x50xi32>
    %112 = arith.extui %111 : vector<1x50xi1> to vector<1x50xi32>
    %113 = arith.sitofp %112 : vector<1x50xi32> to vector<1x50xf32>
    %c0_i32_20 = arith.constant 0 : i32
    %114 = arith.addi %0, %c0_i32_20 : i32
    %c7_i32 = arith.constant 7 : i32
    %115 = arith.addi %114, %c7_i32 : i32
    %116 = arith.index_cast %115 : i32 to index
    %117 = memref.load %arg1[%116] : memref<16xi32, #tpu.memory_space<smem>>
    %118 = vector.broadcast %117 : i32 to vector<1x50xi32>
    %119 = arith.cmpi eq, %1, %118 : vector<1x50xi32>
    %120 = arith.extui %119 : vector<1x50xi1> to vector<1x50xi32>
    %121 = arith.sitofp %120 : vector<1x50xi32> to vector<1x50xf32>
    %c8_i32_21 = arith.constant 8 : i32
    %122 = arith.addi %0, %c8_i32_21 : i32
    %c7_i32_22 = arith.constant 7 : i32
    %123 = arith.addi %122, %c7_i32_22 : i32
    %124 = arith.index_cast %123 : i32 to index
    %125 = memref.load %arg1[%124] : memref<16xi32, #tpu.memory_space<smem>>
    %126 = vector.broadcast %125 : i32 to vector<1x50xi32>
    %127 = arith.cmpi eq, %1, %126 : vector<1x50xi32>
    %128 = arith.extui %127 : vector<1x50xi1> to vector<1x50xi32>
    %129 = arith.sitofp %128 : vector<1x50xi32> to vector<1x50xf32>
    %130 = tpu.concatenate %9, %17, %25, %33, %41, %49, %57, %65, %73, %81, %89, %97, %105, %113, %121, %129 in 0 : vector<1x50xf32>, vector<1x50xf32>, vector<1x50xf32>, vector<1x50xf32>, vector<1x50xf32>, vector<1x50xf32>, vector<1x50xf32>, vector<1x50xf32>, vector<1x50xf32>, vector<1x50xf32>, vector<1x50xf32>, vector<1x50xf32>, vector<1x50xf32>, vector<1x50xf32>, vector<1x50xf32>, vector<1x50xf32> -> vector<16x50xf32>
    %c0 = arith.constant 0 : index
    %c0_23 = arith.constant 0 : index
    %131 = vector.load %arg2[%c0, %c0_23] : memref<50x16xf32, #tpu.memory_space<vmem>>, vector<50x16xf32>
    %cst = arith.constant dense<0.000000e+00> : vector<16x16xf32>
    %132 = tpu.matmul %130, %131, %cst {dimension_numbers = #tpu.dot_dimension_numbers<[1], [0], [0], [1], [0, 0, 1, 1], [], []>} : vector<16x50xf32>, vector<50x16xf32>, vector<16x16xf32> -> vector<16x16xf32>
    %c0_24 = arith.constant 0 : index
    %c0_25 = arith.constant 0 : index
    %133 = vector.load %arg3[%c0_24, %c0_25] : memref<16x32xf32, #tpu.memory_space<vmem>>, vector<16x32xf32>
    %cst_26 = arith.constant dense<0.000000e+00> : vector<16x32xf32>
    %134 = tpu.matmul %132, %133, %cst_26 {dimension_numbers = #tpu.dot_dimension_numbers<[1], [0], [0], [1], [0, 0, 1, 1], [], []>} : vector<16x16xf32>, vector<16x32xf32>, vector<16x32xf32> -> vector<16x32xf32>
    %c0_27 = arith.constant 0 : index
    %c0_28 = arith.constant 0 : index
    %135 = vector.load %arg5[%c0_27, %c0_28] : memref<1x32xf32, #tpu.memory_space<vmem>>, vector<1x32xf32>
    %136 = vector.broadcast %135 : vector<1x32xf32> to vector<16x32xf32>
    %137 = arith.addf %134, %136 : vector<16x32xf32>
    %c0_29 = arith.constant 0 : index
    %c0_30 = arith.constant 0 : index
    %138 = vector.load %arg4[%c0_29, %c0_30] : memref<32x32xf32, #tpu.memory_space<vmem>>, vector<32x32xf32>
    %cst_31 = arith.constant 0.000000e+00 : f32
    %139 = vector.broadcast %cst_31 : f32 to vector<2x32xf32>
    %140 = vector.extract_strided_slice %137 {offsets = [0, 0], sizes = [2, 16], strides = [1, 1]} : vector<16x32xf32> to vector<2x16xf32>
    %141 = vector.extract_strided_slice %137 {offsets = [14, 16], sizes = [2, 16], strides = [1, 1]} : vector<16x32xf32> to vector<2x16xf32>
    %142 = tpu.concatenate %140, %141 in 1 : vector<2x16xf32>, vector<2x16xf32> -> vector<2x32xf32>
    %cst_32 = arith.constant dense<0.000000e+00> : vector<2x32xf32>
    %143 = tpu.matmul %139, %138, %cst_32 {dimension_numbers = #tpu.dot_dimension_numbers<[1], [0], [0], [1], [0, 0, 1, 1], [], []>} : vector<2x32xf32>, vector<32x32xf32>, vector<2x32xf32> -> vector<2x32xf32>
    %144 = arith.addf %142, %143 : vector<2x32xf32>
    %145 = math.tanh %144 : vector<2x32xf32>
    %146 = vector.extract_strided_slice %145 {offsets = [0, 0], sizes = [2, 16], strides = [1, 1]} : vector<2x32xf32> to vector<2x16xf32>
    %147 = vector.extract_strided_slice %145 {offsets = [0, 16], sizes = [2, 16], strides = [1, 1]} : vector<2x32xf32> to vector<2x16xf32>
    %148 = vector.extract_strided_slice %137 {offsets = [2, 0], sizes = [2, 16], strides = [1, 1]} : vector<16x32xf32> to vector<2x16xf32>
    %149 = vector.extract_strided_slice %137 {offsets = [12, 16], sizes = [2, 16], strides = [1, 1]} : vector<16x32xf32> to vector<2x16xf32>
    %150 = tpu.concatenate %148, %149 in 1 : vector<2x16xf32>, vector<2x16xf32> -> vector<2x32xf32>
    %cst_33 = arith.constant dense<0.000000e+00> : vector<2x32xf32>
    %151 = tpu.matmul %145, %138, %cst_33 {dimension_numbers = #tpu.dot_dimension_numbers<[1], [0], [0], [1], [0, 0, 1, 1], [], []>} : vector<2x32xf32>, vector<32x32xf32>, vector<2x32xf32> -> vector<2x32xf32>
    %152 = arith.addf %150, %151 : vector<2x32xf32>
    %153 = math.tanh %152 : vector<2x32xf32>
    %154 = vector.extract_strided_slice %153 {offsets = [0, 0], sizes = [2, 16], strides = [1, 1]} : vector<2x32xf32> to vector<2x16xf32>
    %155 = vector.extract_strided_slice %153 {offsets = [0, 16], sizes = [2, 16], strides = [1, 1]} : vector<2x32xf32> to vector<2x16xf32>
    %156 = vector.extract_strided_slice %137 {offsets = [4, 0], sizes = [2, 16], strides = [1, 1]} : vector<16x32xf32> to vector<2x16xf32>
    %157 = vector.extract_strided_slice %137 {offsets = [10, 16], sizes = [2, 16], strides = [1, 1]} : vector<16x32xf32> to vector<2x16xf32>
    %158 = tpu.concatenate %156, %157 in 1 : vector<2x16xf32>, vector<2x16xf32> -> vector<2x32xf32>
    %cst_34 = arith.constant dense<0.000000e+00> : vector<2x32xf32>
    %159 = tpu.matmul %153, %138, %cst_34 {dimension_numbers = #tpu.dot_dimension_numbers<[1], [0], [0], [1], [0, 0, 1, 1], [], []>} : vector<2x32xf32>, vector<32x32xf32>, vector<2x32xf32> -> vector<2x32xf32>
    %160 = arith.addf %158, %159 : vector<2x32xf32>
    %161 = math.tanh %160 : vector<2x32xf32>
    %162 = vector.extract_strided_slice %161 {offsets = [0, 0], sizes = [2, 16], strides = [1, 1]} : vector<2x32xf32> to vector<2x16xf32>
    %163 = vector.extract_strided_slice %161 {offsets = [0, 16], sizes = [2, 16], strides = [1, 1]} : vector<2x32xf32> to vector<2x16xf32>
    %164 = vector.extract_strided_slice %137 {offsets = [6, 0], sizes = [2, 16], strides = [1, 1]} : vector<16x32xf32> to vector<2x16xf32>
    %165 = vector.extract_strided_slice %137 {offsets = [8, 16], sizes = [2, 16], strides = [1, 1]} : vector<16x32xf32> to vector<2x16xf32>
    %166 = tpu.concatenate %164, %165 in 1 : vector<2x16xf32>, vector<2x16xf32> -> vector<2x32xf32>
    %cst_35 = arith.constant dense<0.000000e+00> : vector<2x32xf32>
    %167 = tpu.matmul %161, %138, %cst_35 {dimension_numbers = #tpu.dot_dimension_numbers<[1], [0], [0], [1], [0, 0, 1, 1], [], []>} : vector<2x32xf32>, vector<32x32xf32>, vector<2x32xf32> -> vector<2x32xf32>
    %168 = arith.addf %166, %167 : vector<2x32xf32>
    %169 = math.tanh %168 : vector<2x32xf32>
    %170 = vector.extract_strided_slice %169 {offsets = [0, 0], sizes = [2, 16], strides = [1, 1]} : vector<2x32xf32> to vector<2x16xf32>
    %171 = vector.extract_strided_slice %169 {offsets = [0, 16], sizes = [2, 16], strides = [1, 1]} : vector<2x32xf32> to vector<2x16xf32>
    %172 = vector.extract_strided_slice %137 {offsets = [8, 0], sizes = [2, 16], strides = [1, 1]} : vector<16x32xf32> to vector<2x16xf32>
    %173 = vector.extract_strided_slice %137 {offsets = [6, 16], sizes = [2, 16], strides = [1, 1]} : vector<16x32xf32> to vector<2x16xf32>
    %174 = tpu.concatenate %172, %173 in 1 : vector<2x16xf32>, vector<2x16xf32> -> vector<2x32xf32>
    %cst_36 = arith.constant dense<0.000000e+00> : vector<2x32xf32>
    %175 = tpu.matmul %169, %138, %cst_36 {dimension_numbers = #tpu.dot_dimension_numbers<[1], [0], [0], [1], [0, 0, 1, 1], [], []>} : vector<2x32xf32>, vector<32x32xf32>, vector<2x32xf32> -> vector<2x32xf32>
    %176 = arith.addf %174, %175 : vector<2x32xf32>
    %177 = math.tanh %176 : vector<2x32xf32>
    %178 = vector.extract_strided_slice %177 {offsets = [0, 0], sizes = [2, 16], strides = [1, 1]} : vector<2x32xf32> to vector<2x16xf32>
    %179 = vector.extract_strided_slice %177 {offsets = [0, 16], sizes = [2, 16], strides = [1, 1]} : vector<2x32xf32> to vector<2x16xf32>
    %180 = vector.extract_strided_slice %137 {offsets = [10, 0], sizes = [2, 16], strides = [1, 1]} : vector<16x32xf32> to vector<2x16xf32>
    %181 = vector.extract_strided_slice %137 {offsets = [4, 16], sizes = [2, 16], strides = [1, 1]} : vector<16x32xf32> to vector<2x16xf32>
    %182 = tpu.concatenate %180, %181 in 1 : vector<2x16xf32>, vector<2x16xf32> -> vector<2x32xf32>
    %cst_37 = arith.constant dense<0.000000e+00> : vector<2x32xf32>
    %183 = tpu.matmul %177, %138, %cst_37 {dimension_numbers = #tpu.dot_dimension_numbers<[1], [0], [0], [1], [0, 0, 1, 1], [], []>} : vector<2x32xf32>, vector<32x32xf32>, vector<2x32xf32> -> vector<2x32xf32>
    %184 = arith.addf %182, %183 : vector<2x32xf32>
    %185 = math.tanh %184 : vector<2x32xf32>
    %186 = vector.extract_strided_slice %185 {offsets = [0, 0], sizes = [2, 16], strides = [1, 1]} : vector<2x32xf32> to vector<2x16xf32>
    %187 = vector.extract_strided_slice %185 {offsets = [0, 16], sizes = [2, 16], strides = [1, 1]} : vector<2x32xf32> to vector<2x16xf32>
    %188 = vector.extract_strided_slice %137 {offsets = [12, 0], sizes = [2, 16], strides = [1, 1]} : vector<16x32xf32> to vector<2x16xf32>
    %189 = vector.extract_strided_slice %137 {offsets = [2, 16], sizes = [2, 16], strides = [1, 1]} : vector<16x32xf32> to vector<2x16xf32>
    %190 = tpu.concatenate %188, %189 in 1 : vector<2x16xf32>, vector<2x16xf32> -> vector<2x32xf32>
    %cst_38 = arith.constant dense<0.000000e+00> : vector<2x32xf32>
    %191 = tpu.matmul %185, %138, %cst_38 {dimension_numbers = #tpu.dot_dimension_numbers<[1], [0], [0], [1], [0, 0, 1, 1], [], []>} : vector<2x32xf32>, vector<32x32xf32>, vector<2x32xf32> -> vector<2x32xf32>
    %192 = arith.addf %190, %191 : vector<2x32xf32>
    %193 = math.tanh %192 : vector<2x32xf32>
    %194 = vector.extract_strided_slice %193 {offsets = [0, 0], sizes = [2, 16], strides = [1, 1]} : vector<2x32xf32> to vector<2x16xf32>
    %195 = vector.extract_strided_slice %193 {offsets = [0, 16], sizes = [2, 16], strides = [1, 1]} : vector<2x32xf32> to vector<2x16xf32>
    %196 = vector.extract_strided_slice %137 {offsets = [14, 0], sizes = [2, 16], strides = [1, 1]} : vector<16x32xf32> to vector<2x16xf32>
    %197 = vector.extract_strided_slice %137 {offsets = [0, 16], sizes = [2, 16], strides = [1, 1]} : vector<16x32xf32> to vector<2x16xf32>
    %198 = tpu.concatenate %196, %197 in 1 : vector<2x16xf32>, vector<2x16xf32> -> vector<2x32xf32>
    %cst_39 = arith.constant dense<0.000000e+00> : vector<2x32xf32>
    %199 = tpu.matmul %193, %138, %cst_39 {dimension_numbers = #tpu.dot_dimension_numbers<[1], [0], [0], [1], [0, 0, 1, 1], [], []>} : vector<2x32xf32>, vector<32x32xf32>, vector<2x32xf32> -> vector<2x32xf32>
    %200 = arith.addf %198, %199 : vector<2x32xf32>
    %201 = math.tanh %200 : vector<2x32xf32>
    %202 = vector.extract_strided_slice %201 {offsets = [0, 0], sizes = [2, 16], strides = [1, 1]} : vector<2x32xf32> to vector<2x16xf32>
    %203 = vector.extract_strided_slice %201 {offsets = [0, 16], sizes = [2, 16], strides = [1, 1]} : vector<2x32xf32> to vector<2x16xf32>
    %204 = tpu.concatenate %146, %203 in 1 : vector<2x16xf32>, vector<2x16xf32> -> vector<2x32xf32>
    %205 = tpu.concatenate %154, %195 in 1 : vector<2x16xf32>, vector<2x16xf32> -> vector<2x32xf32>
    %206 = tpu.concatenate %162, %187 in 1 : vector<2x16xf32>, vector<2x16xf32> -> vector<2x32xf32>
    %207 = tpu.concatenate %170, %179 in 1 : vector<2x16xf32>, vector<2x16xf32> -> vector<2x32xf32>
    %208 = tpu.concatenate %178, %171 in 1 : vector<2x16xf32>, vector<2x16xf32> -> vector<2x32xf32>
    %209 = tpu.concatenate %186, %163 in 1 : vector<2x16xf32>, vector<2x16xf32> -> vector<2x32xf32>
    %210 = tpu.concatenate %194, %155 in 1 : vector<2x16xf32>, vector<2x16xf32> -> vector<2x32xf32>
    %211 = tpu.concatenate %202, %147 in 1 : vector<2x16xf32>, vector<2x16xf32> -> vector<2x32xf32>
    %212 = tpu.concatenate %204, %205, %206, %207, %208, %209, %210, %211 in 0 : vector<2x32xf32>, vector<2x32xf32>, vector<2x32xf32>, vector<2x32xf32>, vector<2x32xf32>, vector<2x32xf32>, vector<2x32xf32>, vector<2x32xf32> -> vector<16x32xf32>
    %c0_40 = arith.constant 0 : index
    %c0_41 = arith.constant 0 : index
    %213 = vector.load %arg6[%c0_40, %c0_41] : memref<32x96xf32, #tpu.memory_space<vmem>>, vector<32x96xf32>
    %cst_42 = arith.constant dense<0.000000e+00> : vector<16x96xf32>
    %214 = tpu.matmul %212, %213, %cst_42 {dimension_numbers = #tpu.dot_dimension_numbers<[1], [0], [0], [1], [0, 0, 1, 1], [], []>} : vector<16x32xf32>, vector<32x96xf32>, vector<16x96xf32> -> vector<16x96xf32>
    %c0_43 = arith.constant 0 : index
    %c0_44 = arith.constant 0 : index
    %215 = vector.load %arg7[%c0_43, %c0_44] : memref<1x96xf32, #tpu.memory_space<vmem>>, vector<1x96xf32>
    %216 = vector.broadcast %215 : vector<1x96xf32> to vector<16x96xf32>
    %217 = arith.addf %214, %216 : vector<16x96xf32>
    %c0_45 = arith.constant 0 : index
    %c0_46 = arith.constant 0 : index
    %218 = vector.load %arg11[%c0_45, %c0_46] : memref<16x96xf32, #tpu.memory_space<vmem>>, vector<16x96xf32>
    tpu.vector_store %arg11[%c0_45, %c0_46], %217 {strides = array<i32>} : memref<16x96xf32, #tpu.memory_space<vmem>>, vector<16x96xf32>,
    %c0_47 = arith.constant 0 : index
    %c0_48 = arith.constant 0 : index
    %219 = tpu.strided_load %arg11[%c0_47, %c0_48] {strides = array<i32: 2, 1>} : memref<16x96xf32, #tpu.memory_space<vmem>>, vector<8x96xf32>
    %220 = vector.extract_strided_slice %219 {offsets = [0, 0], sizes = [8, 32], strides = [1, 1]} : vector<8x96xf32> to vector<8x32xf32>
    %221 = vector.extract_strided_slice %219 {offsets = [0, 32], sizes = [8, 32], strides = [1, 1]} : vector<8x96xf32> to vector<8x32xf32>
    %222 = vector.extract_strided_slice %219 {offsets = [0, 64], sizes = [8, 32], strides = [1, 1]} : vector<8x96xf32> to vector<8x32xf32>
    %cst_49 = arith.constant dense<0.000000e+00> : vector<8x8xf32>
    %223 = tpu.matmul %220, %221, %cst_49 {dimension_numbers = #tpu.dot_dimension_numbers<[1], [1], [0], [0], [0, 0, 1, 0], [], []>} : vector<8x32xf32>, vector<8x32xf32>, vector<8x8xf32> -> vector<8x8xf32>
    %cst_50 = arith.constant 0.176776692 : f32
    %224 = vector.broadcast %cst_50 : f32 to vector<8x8xf32>
    %225 = arith.mulf %223, %224 : vector<8x8xf32>
    %cst_51 = arith.constant dense<0xFF800000> : vector<8xf32>
    %226 = vector.multi_reduction <maximumf>, %225, %cst_51 [1] : vector<8x8xf32> to vector<8xf32>
    %227 = vector.shape_cast %226 : vector<8xf32> to vector<8x1xf32>
    %228 = vector.broadcast %227 : vector<8x1xf32> to vector<8x8xf32>
    %229 = arith.subf %225, %228 : vector<8x8xf32>
    %230 = math.exp %229 : vector<8x8xf32>
    %cst_52 = arith.constant dense<0.000000e+00> : vector<8xf32>
    %231 = vector.multi_reduction <add>, %230, %cst_52 [1] : vector<8x8xf32> to vector<8xf32>
    %232 = vector.shape_cast %231 : vector<8xf32> to vector<8x1xf32>
    %233 = tpu.reciprocal %232 {approx = true} : vector<8x1xf32> -> vector<8x1xf32>
    %234 = vector.broadcast %233 : vector<8x1xf32> to vector<8x8xf32>
    %235 = arith.mulf %230, %234 : vector<8x8xf32>
    %cst_53 = arith.constant dense<0.000000e+00> : vector<8x32xf32>
    %236 = tpu.matmul %235, %222, %cst_53 {dimension_numbers = #tpu.dot_dimension_numbers<[1], [0], [0], [1], [0, 0, 1, 1], [], []>} : vector<8x8xf32>, vector<8x32xf32>, vector<8x32xf32> -> vector<8x32xf32>
    %cst_54 = arith.constant dense<0.000000e+00> : vector<32xf32>
    %237 = vector.multi_reduction <add>, %236, %cst_54 [0] : vector<8x32xf32> to vector<32xf32>
    %238 = vector.shape_cast %237 : vector<32xf32> to vector<1x32xf32>
    %cst_55 = arith.constant 1.250000e-01 : f32
    %239 = vector.broadcast %cst_55 : f32 to vector<1x32xf32>
    %240 = arith.mulf %238, %239 : vector<1x32xf32>
    %c1 = arith.constant 1 : index
    %c0_56 = arith.constant 0 : index
    %241 = tpu.strided_load %arg11[%c1, %c0_56] {strides = array<i32: 2, 1>} : memref<16x96xf32, #tpu.memory_space<vmem>>, vector<8x96xf32>
    %242 = vector.extract_strided_slice %241 {offsets = [0, 0], sizes = [8, 32], strides = [1, 1]} : vector<8x96xf32> to vector<8x32xf32>
    %243 = vector.extract_strided_slice %241 {offsets = [0, 32], sizes = [8, 32], strides = [1, 1]} : vector<8x96xf32> to vector<8x32xf32>
    %244 = vector.extract_strided_slice %241 {offsets = [0, 64], sizes = [8, 32], strides = [1, 1]} : vector<8x96xf32> to vector<8x32xf32>
    %cst_57 = arith.constant dense<0.000000e+00> : vector<8x8xf32>
    %245 = tpu.matmul %242, %243, %cst_57 {dimension_numbers = #tpu.dot_dimension_numbers<[1], [1], [0], [0], [0, 0, 1, 0], [], []>} : vector<8x32xf32>, vector<8x32xf32>, vector<8x8xf32> -> vector<8x8xf32>
    %cst_58 = arith.constant 0.176776692 : f32
    %246 = vector.broadcast %cst_58 : f32 to vector<8x8xf32>
    %247 = arith.mulf %245, %246 : vector<8x8xf32>
    %cst_59 = arith.constant dense<0xFF800000> : vector<8xf32>
    %248 = vector.multi_reduction <maximumf>, %247, %cst_59 [1] : vector<8x8xf32> to vector<8xf32>
    %249 = vector.shape_cast %248 : vector<8xf32> to vector<8x1xf32>
    %250 = vector.broadcast %249 : vector<8x1xf32> to vector<8x8xf32>
    %251 = arith.subf %247, %250 : vector<8x8xf32>
    %252 = math.exp %251 : vector<8x8xf32>
    %cst_60 = arith.constant dense<0.000000e+00> : vector<8xf32>
    %253 = vector.multi_reduction <add>, %252, %cst_60 [1] : vector<8x8xf32> to vector<8xf32>
    %254 = vector.shape_cast %253 : vector<8xf32> to vector<8x1xf32>
    %255 = tpu.reciprocal %254 {approx = true} : vector<8x1xf32> -> vector<8x1xf32>
    %256 = vector.broadcast %255 : vector<8x1xf32> to vector<8x8xf32>
    %257 = arith.mulf %252, %256 : vector<8x8xf32>
    %cst_61 = arith.constant dense<0.000000e+00> : vector<8x32xf32>
    %258 = tpu.matmul %257, %244, %cst_61 {dimension_numbers = #tpu.dot_dimension_numbers<[1], [0], [0], [1], [0, 0, 1, 1], [], []>} : vector<8x8xf32>, vector<8x32xf32>, vector<8x32xf32> -> vector<8x32xf32>
    %cst_62 = arith.constant dense<0.000000e+00> : vector<32xf32>
    %259 = vector.multi_reduction <add>, %258, %cst_62 [0] : vector<8x32xf32> to vector<32xf32>
    %260 = vector.shape_cast %259 : vector<32xf32> to vector<1x32xf32>
    %cst_63 = arith.constant 1.250000e-01 : f32
    %261 = vector.broadcast %cst_63 : f32 to vector<1x32xf32>
    %262 = arith.mulf %260, %261 : vector<1x32xf32>
    %263 = tpu.concatenate %240, %262 in 0 : vector<1x32xf32>, vector<1x32xf32> -> vector<2x32xf32>
    %c0_64 = arith.constant 0 : index
    %c0_65 = arith.constant 0 : index
    %264 = vector.load %arg8[%c0_64, %c0_65] : memref<32x128xf32, #tpu.memory_space<vmem>>, vector<32x128xf32>
    %cst_66 = arith.constant dense<0.000000e+00> : vector<2x128xf32>
    %265 = tpu.matmul %263, %264, %cst_66 {dimension_numbers = #tpu.dot_dimension_numbers<[1], [0], [0], [1], [0, 0, 1, 1], [], []>} : vector<2x32xf32>, vector<32x128xf32>, vector<2x128xf32> -> vector<2x128xf32>
    %c0_67 = arith.constant 0 : index
    %c0_68 = arith.constant 0 : index
    %266 = vector.load %arg9[%c0_67, %c0_68] : memref<1x128xf32, #tpu.memory_space<vmem>>, vector<1x128xf32>
    %267 = vector.broadcast %266 : vector<1x128xf32> to vector<2x128xf32>
    %268 = arith.addf %265, %267 : vector<2x128xf32>
    %c0_69 = arith.constant 0 : index
    %c0_70 = arith.constant 0 : index
    %269 = vector.load %arg10[%c0_69, %c0_70] : memref<2x128xf32, #tpu.memory_space<vmem>>, vector<2x128xf32>
    tpu.vector_store %arg10[%c0_69, %c0_70], %268 {strides = array<i32>} : memref<2x128xf32, #tpu.memory_space<vmem>>, vector<2x128xf32>,
    return
  }
  func.func @transform_0(%arg0: i32, %arg1: memref<16xi32, #tpu.memory_space<smem>>) -> (i32, i32) {
    %c0_i32 = arith.constant 0 : i32
    %c0_i32_0 = arith.constant 0 : i32
    %c0_i32_1 = arith.constant 0 : i32
    return %c0_i32, %c0_i32_0 : i32, i32
  }
  func.func @transform_1(%arg0: i32, %arg1: memref<16xi32, #tpu.memory_space<smem>>) -> (i32, i32) {
    %c0_i32 = arith.constant 0 : i32
    %c0_i32_0 = arith.constant 0 : i32
    %c0_i32_1 = arith.constant 0 : i32
    return %c0_i32, %c0_i32_0 : i32, i32
  }
  func.func @transform_2(%arg0: i32, %arg1: memref<16xi32, #tpu.memory_space<smem>>) -> (i32, i32) {
    %c0_i32 = arith.constant 0 : i32
    %c0_i32_0 = arith.constant 0 : i32
    %c0_i32_1 = arith.constant 0 : i32
    return %c0_i32, %c0_i32_0 : i32, i32
  }
  func.func @transform_3(%arg0: i32, %arg1: memref<16xi32, #tpu.memory_space<smem>>) -> (i32, i32) {
    %c0_i32 = arith.constant 0 : i32
    %c0_i32_0 = arith.constant 0 : i32
    %c0_i32_1 = arith.constant 0 : i32
    return %c0_i32, %c0_i32_0 : i32, i32
  }
  func.func @transform_4(%arg0: i32, %arg1: memref<16xi32, #tpu.memory_space<smem>>) -> (i32, i32) {
    %c0_i32 = arith.constant 0 : i32
    %c0_i32_0 = arith.constant 0 : i32
    %c0_i32_1 = arith.constant 0 : i32
    return %c0_i32, %c0_i32_0 : i32, i32
  }
  func.func @transform_5(%arg0: i32, %arg1: memref<16xi32, #tpu.memory_space<smem>>) -> (i32, i32) {
    %c0_i32 = arith.constant 0 : i32
    %c0_i32_0 = arith.constant 0 : i32
    %c0_i32_1 = arith.constant 0 : i32
    return %c0_i32, %c0_i32_0 : i32, i32
  }
  func.func @transform_6(%arg0: i32, %arg1: memref<16xi32, #tpu.memory_space<smem>>) -> (i32, i32) {
    %c0_i32 = arith.constant 0 : i32
    %c0_i32_0 = arith.constant 0 : i32
    %c0_i32_1 = arith.constant 0 : i32
    return %c0_i32, %c0_i32_0 : i32, i32
  }
  func.func @transform_7(%arg0: i32, %arg1: memref<16xi32, #tpu.memory_space<smem>>) -> (i32, i32) {
    %c0_i32 = arith.constant 0 : i32
    %c0_i32_0 = arith.constant 0 : i32
    %c0_i32_1 = arith.constant 0 : i32
    return %c0_i32, %c0_i32_0 : i32, i32
  }
  func.func @transform_8(%arg0: i32, %arg1: memref<16xi32, #tpu.memory_space<smem>>) -> (i32, i32) {
    %c0_i32 = arith.constant 0 : i32
    %c0_i32_0 = arith.constant 0 : i32
    return %arg0, %c0_i32 : i32, i32
  }
}

</mosaic_0001>

<llo_original>
// kernel: tpu_custom_call.1
$region0: #{tpu_custom_call.1}
  #allocation0 [shape = 'u32[]', space=smem, size = 0x4, offset = 0x4, fixed_abs, tag = 'smem constant byte address 0x4 - core index']
  #allocation1 [shape = 'u32[144,128]{1,0:T(1,128)}', space=vmem, size = 0x12000, scoped, tag = 'internal scratch']
  #allocation2 [shape = 'f32[16,96]{1,0:T(8,128)}', space=vmem, size = 0x2000, scoped, tag = 'scratch operand']
  #allocation3 [shape = 's32[1]{0}', space=sflag, size = 0x4, scoped, tag = 'scoped memory for tpu_custom_call.1']
  #allocation4 [shape = 'u8[512]{0}', space=smem, size = 0x200, scoped, tag = 'prefetched SMEM operand 0']
  %s0 = inlined_call_operand.vmem [shape: s32[16], index: 0, kind: input, shape index: {}]
  %s1 = inlined_call_operand.vmem [shape: f32[50,16], index: 1, kind: input, shape index: {}]
  %s2 = inlined_call_operand.hbm [shape: f32[16,32], index: 2, kind: input, shape index: {}]
  %s3 = inlined_call_operand.vmem [shape: f32[32,32], index: 3, kind: input, shape index: {}]
  %s4 = inlined_call_operand.vmem [shape: f32[1,32], index: 4, kind: input, shape index: {}]
  %s5 = inlined_call_operand.vmem [shape: f32[32,96], index: 5, kind: input, shape index: {}]
  %s6 = inlined_call_operand.hbm [shape: f32[1,96], index: 6, kind: input, shape index: {}]
  %s7 = inlined_call_operand.vmem [shape: f32[32,128], index: 7, kind: input, shape index: {}]
  %s8 = inlined_call_operand.vmem [shape: f32[1,128], index: 8, kind: input, shape index: {}]
  %s9 = inlined_call_operand.hbm [shape: f32[2,128], index: 9, kind: output, shape index: {}]
  %s10 = sld [smem:[#allocation0]]
  $region50: #{tpu_custom_call.1} parent=0
    _
  %s12 = ssub.s32 1, %s10
  %s13 = scalar_select 0, %s12, %s10
  %s14 = sshll.u32 %s0, 4
  %s15 = int_to_ptr.vmem [resolvable:$true] %s14
  %17 = dma.vmem_to_smem %s15, 16, [#allocation4], [#allocation3]
  %18 = dma.done [#allocation3], 16
  %19 = sfence
  $region1: #{tpu_custom_call.1} parent=0
    #allocation5 [shape = 'u8[8192]{0}', space=vmem, size = 0x2000, scoped, tag = 'input window, operand 2, single buffered']
    #allocation6 [shape = 's32[1]{0}', space=sflag, size = 0x4, scoped, tag = 'scoped memory for tpu_custom_call.1']
    #allocation7 [shape = 's32[1]{0}', space=sflag, size = 0x4, scoped, tag = 'scoped memory for tpu_custom_call.1']
    #allocation8 [shape = 'u8[512]{0}', space=vmem, size = 0x400, scoped, tag = 'input window, operand 6, single buffered']
    #allocation9 [shape = 's32[1]{0}', space=sflag, size = 0x4, scoped, tag = 'scoped memory for tpu_custom_call.1']
    #allocation10 [shape = 'u8[1024]{0}', space=vmem, size = 0x400, scoped, tag = 'output window, operand 0, single buffered']
    %20 = vsyncpa [#allocation6], 0
    %21 = vsyncpa [#allocation9], 0
    %22 = vsyncpa [#allocation7], 0
    // Predicated region
    $region2: #{tpu_custom_call.1} parent=1 // pred_check
      _
    $region3: #{tpu_custom_call.1} parent=1 // pred_check_branch
      %24 = sbr.rel (0) target = $region5
    $region4: #{tpu_custom_call.1} parent=1 // pred_region
      _
    $region5: #{tpu_custom_call.1} parent=1 // pred_fallthru
      _
    // Predicated region
    $region6: #{tpu_custom_call.1} parent=1 // pred_check
      _
    $region7: #{tpu_custom_call.1} parent=1 // pred_check_branch
      %26 = sbr.rel (0) target = $region9
    $region8: #{tpu_custom_call.1} parent=1 // pred_region
      %s28 = ssub.s32 256, 256
      %29 = vsyncadd [#allocation6], %s28
      %s30 = sshll.u32 [#allocation5], 4
      %s31 = int_to_ptr.vmem [resolvable:$true] %s30
      %36 = dma.hbm_to_vmem [thread:$0]  %s2, 256, %s31, [#allocation6], 128, 128, 8
    $region9: #{tpu_custom_call.1} parent=1 // pred_fallthru
      _
    // Predicated region
    $region10: #{tpu_custom_call.1} parent=1 // pred_check
      _
    $region11: #{tpu_custom_call.1} parent=1 // pred_check_branch
      %38 = sbr.rel (0) target = $region13
    $region12: #{tpu_custom_call.1} parent=1 // pred_region
      _
    $region13: #{tpu_custom_call.1} parent=1 // pred_fallthru
      _
    // Predicated region
    $region14: #{tpu_custom_call.1} parent=1 // pred_check
      _
    $region15: #{tpu_custom_call.1} parent=1 // pred_check_branch
      %40 = sbr.rel (0) target = $region17
    $region16: #{tpu_custom_call.1} parent=1 // pred_region
      _
    $region17: #{tpu_custom_call.1} parent=1 // pred_fallthru
      _
    // Predicated region
    $region18: #{tpu_custom_call.1} parent=1 // pred_check
      _
    $region19: #{tpu_custom_call.1} parent=1 // pred_check_branch
      %42 = sbr.rel (0) target = $region21
    $region20: #{tpu_custom_call.1} parent=1 // pred_region
      _
    $region21: #{tpu_custom_call.1} parent=1 // pred_fallthru
      _
    // Predicated region
    $region22: #{tpu_custom_call.1} parent=1 // pred_check
      _
    $region23: #{tpu_custom_call.1} parent=1 // pred_check_branch
      %44 = sbr.rel (0) target = $region25
    $region24: #{tpu_custom_call.1} parent=1 // pred_region
      %s46 = ssub.s32 16, 16
      %47 = vsyncadd [#allocation9], %s46
      %s49 = sshll.u32 [#allocation8], 4
      %s50 = int_to_ptr.vmem [resolvable:$true] %s49
      %52 = dma.hbm_to_vmem [thread:$0]  %s6, 16, %s50, [#allocation9]
    $region25: #{tpu_custom_call.1} parent=1 // pred_fallthru
      _
    // Predicated region
    $region26: #{tpu_custom_call.1} parent=1 // pred_check
      _
    $region27: #{tpu_custom_call.1} parent=1 // pred_check_branch
      %54 = sbr.rel (0) target = $region29
    $region28: #{tpu_custom_call.1} parent=1 // pred_region
      _
    $region29: #{tpu_custom_call.1} parent=1 // pred_fallthru
      _
    // Predicated region
    $region30: #{tpu_custom_call.1} parent=1 // pred_check
      _
    $region31: #{tpu_custom_call.1} parent=1 // pred_check_branch
      %56 = sbr.rel (0) target = $region33
    $region32: #{tpu_custom_call.1} parent=1 // pred_region
      _
    $region33: #{tpu_custom_call.1} parent=1 // pred_fallthru
      _
    // Predicated region
    $region34: #{tpu_custom_call.1} parent=1 // pred_check
      _
    $region35: #{tpu_custom_call.1} parent=1 // pred_check_branch
      %58 = sbr.rel (0) target = $region37
    $region36: #{tpu_custom_call.1} parent=1 // pred_region
      %59 = dma.done [#allocation6], 256
    $region37: #{tpu_custom_call.1} parent=1 // pred_fallthru
      _
    // Predicated region
    $region38: #{tpu_custom_call.1} parent=1 // pred_check
      _
    $region39: #{tpu_custom_call.1} parent=1 // pred_check_branch
      %61 = sbr.rel (0) target = $region41
    $region40: #{tpu_custom_call.1} parent=1 // pred_region
      %62 = dma.done [#allocation9], 16
    $region41: #{tpu_custom_call.1} parent=1 // pred_fallthru
      _
    %s63 = smul.u32 0, 16
    %v64 = vlaneseq
    %v65 = vand.u32 %v64, 127
    %s66 = sld [smem:[#allocation4 + %s63]]
    %v67 = vstv %s66
    %vm68 = vcmp.eq.s32.totalorder %v65, %v67
    %v69 = vsel %vm68, 1, 0
    %v70 = vcvt.s32.f32 %v69
    %s71 = sadd.s32 %s63, 8
    %s72 = sld [smem:[#allocation4 + %s71]]
    %v73 = vstv %s72
    %vm74 = vcmp.eq.s32.totalorder %v65, %v73
    %v75 = vsel %vm74, 1, 0
    %v76 = vcvt.s32.f32 %v75
    %s77 = sadd.s32 %s63, 1
    %s78 = sld [smem:[#allocation4 + %s77]]
    %v79 = vstv %s78
    %vm80 = vcmp.eq.s32.totalorder %v65, %v79
    %v81 = vsel %vm80, 1, 0
    %v82 = vcvt.s32.f32 %v81
    %s83 = sadd.s32 %s63, 9
    %s84 = sld [smem:[#allocation4 + %s83]]
    %v85 = vstv %s84
    %vm86 = vcmp.eq.s32.totalorder %v65, %v85
    %v87 = vsel %vm86, 1, 0
    %v88 = vcvt.s32.f32 %v87
    %s89 = sadd.s32 %s63, 2
    %s90 = sld [smem:[#allocation4 + %s89]]
    %v91 = vstv %s90
    %vm92 = vcmp.eq.s32.totalorder %v65, %v91
    %v93 = vsel %vm92, 1, 0
    %v94 = vcvt.s32.f32 %v93
    %s95 = sadd.s32 %s63, 10
    %s96 = sld [smem:[#allocation4 + %s95]]
    %v97 = vstv %s96
    %vm98 = vcmp.eq.s32.totalorder %v65, %v97
    %v99 = vsel %vm98, 1, 0
    %v100 = vcvt.s32.f32 %v99
    %s101 = sadd.s32 %s63, 3
    %s102 = sld [smem:[#allocation4 + %s101]]
    %v103 = vstv %s102
    %vm104 = vcmp.eq.s32.totalorder %v65, %v103
    %v105 = vsel %vm104, 1, 0
    %v106 = vcvt.s32.f32 %v105
    %s107 = sadd.s32 %s63, 11
    %s108 = sld [smem:[#allocation4 + %s107]]
    %v109 = vstv %s108
    %vm110 = vcmp.eq.s32.totalorder %v65, %v109
    %v111 = vsel %vm110, 1, 0
    %v112 = vcvt.s32.f32 %v111
    %s113 = sadd.s32 %s63, 4
    %s114 = sld [smem:[#allocation4 + %s113]]
    %v115 = vstv %s114
    %vm116 = vcmp.eq.s32.totalorder %v65, %v115
    %v117 = vsel %vm116, 1, 0
    %v118 = vcvt.s32.f32 %v117
    %s119 = sadd.s32 %s63, 12
    %s120 = sld [smem:[#allocation4 + %s119]]
    %v121 = vstv %s120
    %vm122 = vcmp.eq.s32.totalorder %v65, %v121
    %v123 = vsel %vm122, 1, 0
    %v124 = vcvt.s32.f32 %v123
    %s125 = sadd.s32 %s63, 5
    %s126 = sld [smem:[#allocation4 + %s125]]
    %v127 = vstv %s126
    %vm128 = vcmp.eq.s32.totalorder %v65, %v127
    %v129 = vsel %vm128, 1, 0
    %v130 = vcvt.s32.f32 %v129
    %s131 = sadd.s32 %s63, 13
    %s132 = sld [smem:[#allocation4 + %s131]]
    %v133 = vstv %s132
    %vm134 = vcmp.eq.s32.totalorder %v65, %v133
    %v135 = vsel %vm134, 1, 0
    %v136 = vcvt.s32.f32 %v135
    %s137 = sadd.s32 %s63, 6
    %s138 = sld [smem:[#allocation4 + %s137]]
    %v139 = vstv %s138
    %vm140 = vcmp.eq.s32.totalorder %v65, %v139
    %v141 = vsel %vm140, 1, 0
    %v142 = vcvt.s32.f32 %v141
    %s143 = sadd.s32 %s63, 14
    %s144 = sld [smem:[#allocation4 + %s143]]
    %v145 = vstv %s144
    %vm146 = vcmp.eq.s32.totalorder %v65, %v145
    %v147 = vsel %vm146, 1, 0
    %v148 = vcvt.s32.f32 %v147
    %s149 = sadd.s32 %s63, 7
    %s150 = sld [smem:[#allocation4 + %s149]]
    %v151 = vstv %s150
    %vm152 = vcmp.eq.s32.totalorder %v65, %v151
    %v153 = vsel %vm152, 1, 0
    %v154 = vcvt.s32.f32 %v153
    %s155 = sadd.s32 %s63, 15
    %s156 = sld [smem:[#allocation4 + %s155]]
    %v157 = vstv %s156
    %vm158 = vcmp.eq.s32.totalorder %v65, %v157
    %v159 = vsel %vm158, 1, 0
    %v160 = vcvt.s32.f32 %v159
    %vm161 = vcmask 1040384
    %v162 = vsel %vm161, %v70, %v76
    %vm163 = vcmask 1041408
    %v164 = vsel %vm163, %v162, %v82
    %vm165 = vcmask 1042432
    %v166 = vsel %vm165, %v164, %v88
    %vm167 = vcmask 1043456
    %v168 = vsel %vm167, %v166, %v94
    %vm169 = vcmask 1044480
    %v170 = vsel %vm169, %v168, %v100
    %vm171 = vcmask 1045504
    %v172 = vsel %vm171, %v170, %v106
    %vm173 = vcmask 1046528
    %v174 = vsel %vm173, %v172, %v112
    %v175 = vsel %vm161, %v118, %v124
    %v176 = vsel %vm163, %v175, %v130
    %v177 = vsel %vm165, %v176, %v136
    %v178 = vsel %vm167, %v177, %v142
    %v179 = vsel %vm169, %v178, %v148
    %v180 = vsel %vm171, %v179, %v154
    %v181 = vsel %vm173, %v180, %v160
    %v182 = vld [vmem:[%s1] sm:$0xff]
    %v183 = vld [vmem:[%s1 + $0x8] sm:$0xff]
    %v184 = vld [vmem:[%s1 + $0x10] sm:$0xff]
    %v185 = vld [vmem:[%s1 + $0x18] sm:$0xff]
    %v186 = vld [vmem:[%s1 + $0x20] sm:$0xff]
    %v187 = vld [vmem:[%s1 + $0x28] sm:$0xff]
    %v188 = vld [vmem:[%s1 + $0x30] sm:$0x3]
    %vm189 = vcmask 408576
    %v191 = vsel %vm189, %v174, 0
    %v194 = vsel %vm189, %v181, 0
    %v197 = vsel %vm163, %v188, 0
    %199 = vmatprep.subr.mxu0 0.0
    %200 = vmatpush1.msra.mxu0 %v182
    %201 = vmatprep.subr.mxu0 0.0
    %202 = vmatpush1.msra.mxu0 %v183
    %203 = vmatprep.subr.mxu0 0.0
    %204 = vmatpush1.msra.mxu0 %v184
    %205 = vmatprep.subr.mxu0 0.0
    %206 = vmatpush1.msra.mxu0 %v185
    %207 = vmatprep.subr.mxu0 0.0
    %208 = vmatpush1.msra.mxu0 %v186
    %209 = vmatprep.subr.mxu0 0.0
    %210 = vmatpush1.msra.mxu0 %v187
    %211 = vmatprep.subr.mxu0 0.0
    %212 = vmatpush1.msra.mxu0 %v197
    %213 = vmatprep.subr.mxu0 0.0
    %214 = vmatpush1.msra.mxu0 0.0
    %215 = vmatprep.subr.mxu0 0.0
    %216 = vmatpush1.msra.mxu0 0.0
    %217 = vmatprep.subr.mxu0 0.0
    %218 = vmatpush1.msra.mxu0 0.0
    %219 = vmatprep.subr.mxu0 0.0
    %220 = vmatpush1.msra.mxu0 0.0
    %221 = vmatprep.subr.mxu0 0.0
    %222 = vmatpush1.msra.mxu0 0.0
    %223 = vmatprep.subr.mxu0 0.0
    %224 = vmatpush1.msra.mxu0 0.0
    %225 = vmatprep.subr.mxu0 0.0
    %226 = vmatpush1.msra.mxu0 0.0
    %227 = vmatprep.subr.mxu0 0.0
    %228 = vmatpush1.msra.mxu0 0.0
    %229 = vmatprep.subr.mxu0 0.0
    %230 = vmatpush1.msra.mxu0 0.0
    %231 = vmatprep.subr.mxu0 0.0
    %232 = vmatpush1.msra.mxu0 0.0
    %233 = vmatprep.subr.mxu0 0.0
    %234 = vmatpush1.msra.mxu0 0.0
    %235 = vmatprep.subr.mxu0 0.0
    %236 = vmatpush1.msra.mxu0 0.0
    %237 = vmatprep.subr.mxu0 0.0
    %238 = vmatpush1.msra.mxu0 0.0
    %239 = vmatprep.subr.mxu0 0.0
    %240 = vmatpush1.msra.mxu0 0.0
    %241 = vmatprep.subr.mxu0 0.0
    %242 = vmatpush1.msra.mxu0 0.0
    %243 = vmatprep.subr.mxu0 0.0
    %244 = vmatpush1.msra.mxu0 0.0
    %245 = vmatprep.subr.mxu0 0.0
    %246 = vmatpush1.msra.mxu0 0.0
    %247 = vmatprep.subr.mxu0 0.0
    %248 = vmatpush1.msra.mxu0 0.0
    %249 = vmatprep.subr.mxu0 0.0
    %250 = vmatpush1.msra.mxu0 0.0
    %251 = vmatprep.subr.mxu0 0.0
    %252 = vmatpush1.msra.mxu0 0.0
    %253 = vmatprep.subr.mxu0 0.0
    %254 = vmatpush1.msra.mxu0 0.0
    %255 = vmatprep.subr.mxu0 0.0
    %256 = vmatpush1.msra.mxu0 0.0
    %257 = vmatprep.subr.mxu0 0.0
    %258 = vmatpush1.msra.mxu0 0.0
    %259 = vmatprep.subr.mxu0 0.0
    %260 = vmatpush1.msra.mxu0 0.0
    %261 = vmatprep.subr.mxu0 0.0
    %262 = vmatpush1.msra.mxu0 0.0
    %263 = vmatprep.mubr.f32.mxu0 0.0
    %264 = vmatmul.mubr.f32.gmra.mrb[0].mxu0 %v191
    %v265 = vpop.f32.mrb[0].mxu0
    %v266 = vadd.f32 0.0, %v265
    %v267 = vpop.f32.mrb[0].mxu0
    %268 = vmatprep.mubr.f32.mxu0 0.0
    %269 = vmatmul.mubr.f32.gmra.mrb[0].mxu0 %v194
    %v270 = vpop.f32.mrb[0].mxu0
    %v271 = vadd.f32 0.0, %v270
    %v272 = vpop.f32.mrb[0].mxu0
    %273 = vdwg.mxu0
    %v274 = vld [vmem:[#allocation5] sm:$0xff]
    %v275 = vld [vmem:[#allocation5 + $0x8] sm:$0xff]
    %v276 = vld [vmem:[%s4] sm:$0x1]
    %v278 = vlaneseq
    %v279 = vshrl.u32 %v278, 7
    %v280 = vsub.s32 0, %v279
    %v281 = vrot.slane %v276, %v280
    %vm283 = vcmask 130048
    %v285 = vsel %vm283, %v266, 0
    %v288 = vsel %vm283, %v271, 0
    %290 = vmatprep.subr.mxu0 0.0
    %291 = vmatpush1.msra.mxu0 %v274
    %292 = vmatprep.subr.mxu0 0.0
    %293 = vmatpush1.msra.mxu0 %v275
    %294 = vmatprep.subr.mxu0 0.0
    %295 = vmatpush1.msra.mxu0 0.0
    %296 = vmatprep.subr.mxu0 0.0
    %297 = vmatpush1.msra.mxu0 0.0
    %298 = vmatprep.subr.mxu0 0.0
    %299 = vmatpush1.msra.mxu0 0.0
    %300 = vmatprep.subr.mxu0 0.0
    %301 = vmatpush1.msra.mxu0 0.0
    %302 = vmatprep.subr.mxu0 0.0
    %303 = vmatpush1.msra.mxu0 0.0
    %304 = vmatprep.subr.mxu0 0.0
    %305 = vmatpush1.msra.mxu0 0.0
    %306 = vmatprep.subr.mxu0 0.0
    %307 = vmatpush1.msra.mxu0 0.0
    %308 = vmatprep.subr.mxu0 0.0
    %309 = vmatpush1.msra.mxu0 0.0
    %310 = vmatprep.subr.mxu0 0.0
    %311 = vmatpush1.msra.mxu0 0.0
    %312 = vmatprep.subr.mxu0 0.0
    %313 = vmatpush1.msra.mxu0 0.0
    %314 = vmatprep.subr.mxu0 0.0
    %315 = vmatpush1.msra.mxu0 0.0
    %316 = vmatprep.subr.mxu0 0.0
    %317 = vmatpush1.msra.mxu0 0.0
    %318 = vmatprep.subr.mxu0 0.0
    %319 = vmatpush1.msra.mxu0 0.0
    %320 = vmatprep.subr.mxu0 0.0
    %321 = vmatpush1.msra.mxu0 0.0
    %322 = vmatprep.subr.mxu0 0.0
    %323 = vmatpush1.msra.mxu0 0.0
    %324 = vmatprep.subr.mxu0 0.0
    %325 = vmatpush1.msra.mxu0 0.0
    %326 = vmatprep.subr.mxu0 0.0
    %327 = vmatpush1.msra.mxu0 0.0
    %328 = vmatprep.subr.mxu0 0.0
    %329 = vmatpush1.msra.mxu0 0.0
    %330 = vmatprep.subr.mxu0 0.0
    %331 = vmatpush1.msra.mxu0 0.0
    %332 = vmatprep.subr.mxu0 0.0
    %333 = vmatpush1.msra.mxu0 0.0
    %334 = vmatprep.subr.mxu0 0.0
    %335 = vmatpush1.msra.mxu0 0.0
    %336 = vmatprep.subr.mxu0 0.0
    %337 = vmatpush1.msra.mxu0 0.0
    %338 = vmatprep.subr.mxu0 0.0
    %339 = vmatpush1.msra.mxu0 0.0
    %340 = vmatprep.subr.mxu0 0.0
    %341 = vmatpush1.msra.mxu0 0.0
    %342 = vmatprep.subr.mxu0 0.0
    %343 = vmatpush1.msra.mxu0 0.0
    %344 = vmatprep.subr.mxu0 0.0
    %345 = vmatpush1.msra.mxu0 0.0
    %346 = vmatprep.subr.mxu0 0.0
    %347 = vmatpush1.msra.mxu0 0.0
    %348 = vmatprep.subr.mxu0 0.0
    %349 = vmatpush1.msra.mxu0 0.0
    %350 = vmatprep.subr.mxu0 0.0
    %351 = vmatpush1.msra.mxu0 0.0
    %352 = vmatprep.subr.mxu0 0.0
    %353 = vmatpush1.msra.mxu0 0.0
    %354 = vmatprep.mubr.f32.mxu0 0.0
    %355 = vmatmul.mubr.f32.gmra.mrb[0].mxu0 %v285
    %v356 = vpop.f32.mrb[0].mxu0
    %v357 = vadd.f32 %v281, %v356
    %v358 = vpop.f32.mrb[0].mxu0
    %359 = vmatprep.mubr.f32.mxu0 0.0
    %360 = vmatmul.mubr.f32.gmra.mrb[0].mxu0 %v288
    %v361 = vpop.f32.mrb[0].mxu0
    %v362 = vadd.f32 %v281, %v361
    %v363 = vpop.f32.mrb[0].mxu0
    %364 = vdwg.mxu0
    %v365 = vld [vmem:[%s3] sm:$0xff]
    %v366 = vld [vmem:[%s3 + $0x8] sm:$0xff]
    %v367 = vld [vmem:[%s3 + $0x10] sm:$0xff]
    %v368 = vld [vmem:[%s3 + $0x18] sm:$0xff]
    %v370 = vrot.slane %v362, 6
    %v372 = vsel %vm283, %v357, %v370
    %vm373 = vcmask 261120
    %v375 = vsel %vm373, 0.0, 0
    %377 = vmatprep.subr.mxu0 0.0
    %378 = vmatpush1.msra.mxu0 %v365
    %379 = vmatprep.subr.mxu0 0.0
    %380 = vmatpush1.msra.mxu0 %v366
    %381 = vmatprep.subr.mxu0 0.0
    %382 = vmatpush1.msra.mxu0 %v367
    %383 = vmatprep.subr.mxu0 0.0
    %384 = vmatpush1.msra.mxu0 %v368
    %385 = vmatprep.subr.mxu0 0.0
    %386 = vmatpush1.msra.mxu0 0.0
    %387 = vmatprep.subr.mxu0 0.0
    %388 = vmatpush1.msra.mxu0 0.0
    %389 = vmatprep.subr.mxu0 0.0
    %390 = vmatpush1.msra.mxu0 0.0
    %391 = vmatprep.subr.mxu0 0.0
    %392 = vmatpush1.msra.mxu0 0.0
    %393 = vmatprep.subr.mxu0 0.0
    %394 = vmatpush1.msra.mxu0 0.0
    %395 = vmatprep.subr.mxu0 0.0
    %396 = vmatpush1.msra.mxu0 0.0
    %397 = vmatprep.subr.mxu0 0.0
    %398 = vmatpush1.msra.mxu0 0.0
    %399 = vmatprep.subr.mxu0 0.0
    %400 = vmatpush1.msra.mxu0 0.0
    %401 = vmatprep.subr.mxu0 0.0
    %402 = vmatpush1.msra.mxu0 0.0
    %403 = vmatprep.subr.mxu0 0.0
    %404 = vmatpush1.msra.mxu0 0.0
    %405 = vmatprep.subr.mxu0 0.0
    %406 = vmatpush1.msra.mxu0 0.0
    %407 = vmatprep.subr.mxu0 0.0
    %408 = vmatpush1.msra.mxu0 0.0
    %409 = vmatprep.subr.mxu0 0.0
    %410 = vmatpush1.msra.mxu0 0.0
    %411 = vmatprep.subr.mxu0 0.0
    %412 = vmatpush1.msra.mxu0 0.0
    %413 = vmatprep.subr.mxu0 0.0
    %414 = vmatpush1.msra.mxu0 0.0
    %415 = vmatprep.subr.mxu0 0.0
    %416 = vmatpush1.msra.mxu0 0.0
    %417 = vmatprep.subr.mxu0 0.0
    %418 = vmatpush1.msra.mxu0 0.0
    %419 = vmatprep.subr.mxu0 0.0
    %420 = vmatpush1.msra.mxu0 0.0
    %421 = vmatprep.subr.mxu0 0.0
    %422 = vmatpush1.msra.mxu0 0.0
    %423 = vmatprep.subr.mxu0 0.0
    %424 = vmatpush1.msra.mxu0 0.0
    %425 = vmatprep.subr.mxu0 0.0
    %426 = vmatpush1.msra.mxu0 0.0
    %427 = vmatprep.subr.mxu0 0.0
    %428 = vmatpush1.msra.mxu0 0.0
    %429 = vmatprep.subr.mxu0 0.0
    %430 = vmatpush1.msra.mxu0 0.0
    %431 = vmatprep.subr.mxu0 0.0
    %432 = vmatpush1.msra.mxu0 0.0
    %433 = vmatprep.subr.mxu0 0.0
    %434 = vmatpush1.msra.mxu0 0.0
    %435 = vmatprep.subr.mxu0 0.0
    %436 = vmatpush1.msra.mxu0 0.0
    %437 = vmatprep.subr.mxu0 0.0
    %438 = vmatpush1.msra.mxu0 0.0
    %439 = vmatprep.subr.mxu0 0.0
    %440 = vmatpush1.msra.mxu0 0.0
    %441 = vmatprep.mubr.f32.mxu0 0.0
    %442 = vmatmul.mubr.f32.gmra.mrb[0].mxu0 %v375
    %v443 = vpop.f32.mrb[0].mxu0
    %v444 = vadd.f32 0.0, %v443
    %v445 = vpop.f32.mrb[0].mxu0
    %446 = vdwg.mxu0
    %v447 = vadd.f32 %v372, %v444
    %v448 = vtanh.pop %v447
    %v449 = vrot.slane %v362, 2
    %v451 = vsel %vm283, %v357, %v449
    %v453 = vsel %vm373, %v448, 0
    %455 = vmatprep.subr.mxu0 0.0
    %456 = vmatpush1.msra.mxu0 %v365
    %457 = vmatprep.subr.mxu0 0.0
    %458 = vmatpush1.msra.mxu0 %v366
    %459 = vmatprep.subr.mxu0 0.0
    %460 = vmatpush1.msra.mxu0 %v367
    %461 = vmatprep.subr.mxu0 0.0
    %462 = vmatpush1.msra.mxu0 %v368
    %463 = vmatprep.subr.mxu0 0.0
    %464 = vmatpush1.msra.mxu0 0.0
    %465 = vmatprep.subr.mxu0 0.0
    %466 = vmatpush1.msra.mxu0 0.0
    %467 = vmatprep.subr.mxu0 0.0
    %468 = vmatpush1.msra.mxu0 0.0
    %469 = vmatprep.subr.mxu0 0.0
    %470 = vmatpush1.msra.mxu0 0.0
    %471 = vmatprep.subr.mxu0 0.0
    %472 = vmatpush1.msra.mxu0 0.0
    %473 = vmatprep.subr.mxu0 0.0
    %474 = vmatpush1.msra.mxu0 0.0
    %475 = vmatprep.subr.mxu0 0.0
    %476 = vmatpush1.msra.mxu0 0.0
    %477 = vmatprep.subr.mxu0 0.0
    %478 = vmatpush1.msra.mxu0 0.0
    %479 = vmatprep.subr.mxu0 0.0
    %480 = vmatpush1.msra.mxu0 0.0
    %481 = vmatprep.subr.mxu0 0.0
    %482 = vmatpush1.msra.mxu0 0.0
    %483 = vmatprep.subr.mxu0 0.0
    %484 = vmatpush1.msra.mxu0 0.0
    %485 = vmatprep.subr.mxu0 0.0
    %486 = vmatpush1.msra.mxu0 0.0
    %487 = vmatprep.subr.mxu0 0.0
    %488 = vmatpush1.msra.mxu0 0.0
    %489 = vmatprep.subr.mxu0 0.0
    %490 = vmatpush1.msra.mxu0 0.0
    %491 = vmatprep.subr.mxu0 0.0
    %492 = vmatpush1.msra.mxu0 0.0
    %493 = vmatprep.subr.mxu0 0.0
    %494 = vmatpush1.msra.mxu0 0.0
    %495 = vmatprep.subr.mxu0 0.0
    %496 = vmatpush1.msra.mxu0 0.0
    %497 = vmatprep.subr.mxu0 0.0
    %498 = vmatpush1.msra.mxu0 0.0
    %499 = vmatprep.subr.mxu0 0.0
    %500 = vmatpush1.msra.mxu0 0.0
    %501 = vmatprep.subr.mxu0 0.0
    %502 = vmatpush1.msra.mxu0 0.0
    %503 = vmatprep.subr.mxu0 0.0
    %504 = vmatpush1.msra.mxu0 0.0
    %505 = vmatprep.subr.mxu0 0.0
    %506 = vmatpush1.msra.mxu0 0.0
    %507 = vmatprep.subr.mxu0 0.0
    %508 = vmatpush1.msra.mxu0 0.0
    %509 = vmatprep.subr.mxu0 0.0
    %510 = vmatpush1.msra.mxu0 0.0
    %511 = vmatprep.subr.mxu0 0.0
    %512 = vmatpush1.msra.mxu0 0.0
    %513 = vmatprep.subr.mxu0 0.0
    %514 = vmatpush1.msra.mxu0 0.0
    %515 = vmatprep.subr.mxu0 0.0
    %516 = vmatpush1.msra.mxu0 0.0
    %517 = vmatprep.subr.mxu0 0.0
    %518 = vmatpush1.msra.mxu0 0.0
    %519 = vmatprep.mubr.f32.mxu0 0.0
    %520 = vmatmul.mubr.f32.gmra.mrb[0].mxu0 %v453
    %v521 = vpop.f32.mrb[0].mxu0
    %v522 = vadd.f32 0.0, %v521
    %v523 = vpop.f32.mrb[0].mxu0
    %524 = vdwg.mxu0
    %v526 = vrot.slane %v522, 6
    %v528 = vadd.f32 %v451, %v526
    %v529 = vtanh.pop %v528
    %v531 = vrot.slane %v529, 2
    %v532 = vsel %vm373, %v531, 0
    %534 = vmatprep.subr.mxu0 0.0
    %535 = vmatpush1.msra.mxu0 %v365
    %536 = vmatprep.subr.mxu0 0.0
    %537 = vmatpush1.msra.mxu0 %v366
    %538 = vmatprep.subr.mxu0 0.0
    %539 = vmatpush1.msra.mxu0 %v367
    %540 = vmatprep.subr.mxu0 0.0
    %541 = vmatpush1.msra.mxu0 %v368
    %542 = vmatprep.subr.mxu0 0.0
    %543 = vmatpush1.msra.mxu0 0.0
    %544 = vmatprep.subr.mxu0 0.0
    %545 = vmatpush1.msra.mxu0 0.0
    %546 = vmatprep.subr.mxu0 0.0
    %547 = vmatpush1.msra.mxu0 0.0
    %548 = vmatprep.subr.mxu0 0.0
    %549 = vmatpush1.msra.mxu0 0.0
    %550 = vmatprep.subr.mxu0 0.0
    %551 = vmatpush1.msra.mxu0 0.0
    %552 = vmatprep.subr.mxu0 0.0
    %553 = vmatpush1.msra.mxu0 0.0
    %554 = vmatprep.subr.mxu0 0.0
    %555 = vmatpush1.msra.mxu0 0.0
    %556 = vmatprep.subr.mxu0 0.0
    %557 = vmatpush1.msra.mxu0 0.0
    %558 = vmatprep.subr.mxu0 0.0
    %559 = vmatpush1.msra.mxu0 0.0
    %560 = vmatprep.subr.mxu0 0.0
    %561 = vmatpush1.msra.mxu0 0.0
    %562 = vmatprep.subr.mxu0 0.0
    %563 = vmatpush1.msra.mxu0 0.0
    %564 = vmatprep.subr.mxu0 0.0
    %565 = vmatpush1.msra.mxu0 0.0
    %566 = vmatprep.subr.mxu0 0.0
    %567 = vmatpush1.msra.mxu0 0.0
    %568 = vmatprep.subr.mxu0 0.0
    %569 = vmatpush1.msra.mxu0 0.0
    %570 = vmatprep.subr.mxu0 0.0
    %571 = vmatpush1.msra.mxu0 0.0
    %572 = vmatprep.subr.mxu0 0.0
    %573 = vmatpush1.msra.mxu0 0.0
    %574 = vmatprep.subr.mxu0 0.0
    %575 = vmatpush1.msra.mxu0 0.0
    %576 = vmatprep.subr.mxu0 0.0
    %577 = vmatpush1.msra.mxu0 0.0
    %578 = vmatprep.subr.mxu0 0.0
    %579 = vmatpush1.msra.mxu0 0.0
    %580 = vmatprep.subr.mxu0 0.0
    %581 = vmatpush1.msra.mxu0 0.0
    %582 = vmatprep.subr.mxu0 0.0
    %583 = vmatpush1.msra.mxu0 0.0
    %584 = vmatprep.subr.mxu0 0.0
    %585 = vmatpush1.msra.mxu0 0.0
    %586 = vmatprep.subr.mxu0 0.0
    %587 = vmatpush1.msra.mxu0 0.0
    %588 = vmatprep.subr.mxu0 0.0
    %589 = vmatpush1.msra.mxu0 0.0
    %590 = vmatprep.subr.mxu0 0.0
    %591 = vmatpush1.msra.mxu0 0.0
    %592 = vmatprep.subr.mxu0 0.0
    %593 = vmatpush1.msra.mxu0 0.0
    %594 = vmatprep.subr.mxu0 0.0
    %595 = vmatpush1.msra.mxu0 0.0
    %596 = vmatprep.subr.mxu0 0.0
    %597 = vmatpush1.msra.mxu0 0.0
    %598 = vmatprep.mubr.f32.mxu0 0.0
    %599 = vmatmul.mubr.f32.gmra.mrb[0].mxu0 %v532
    %v600 = vpop.f32.mrb[0].mxu0
    %v601 = vadd.f32 0.0, %v600
    %v602 = vpop.f32.mrb[0].mxu0
    %603 = vdwg.mxu0
    %v605 = vrot.slane %v601, 4
    %v607 = vadd.f32 %v372, %v605
    %v608 = vtanh.pop %v607
    %v610 = vrot.slane %v608, 4
    %v611 = vsel %vm373, %v610, 0
    %613 = vmatprep.subr.mxu0 0.0
    %614 = vmatpush1.msra.mxu0 %v365
    %615 = vmatprep.subr.mxu0 0.0
    %616 = vmatpush1.msra.mxu0 %v366
    %617 = vmatprep.subr.mxu0 0.0
    %618 = vmatpush1.msra.mxu0 %v367
    %619 = vmatprep.subr.mxu0 0.0
    %620 = vmatpush1.msra.mxu0 %v368
    %621 = vmatprep.subr.mxu0 0.0
    %622 = vmatpush1.msra.mxu0 0.0
    %623 = vmatprep.subr.mxu0 0.0
    %624 = vmatpush1.msra.mxu0 0.0
    %625 = vmatprep.subr.mxu0 0.0
    %626 = vmatpush1.msra.mxu0 0.0
    %627 = vmatprep.subr.mxu0 0.0
    %628 = vmatpush1.msra.mxu0 0.0
    %629 = vmatprep.subr.mxu0 0.0
    %630 = vmatpush1.msra.mxu0 0.0
    %631 = vmatprep.subr.mxu0 0.0
    %632 = vmatpush1.msra.mxu0 0.0
    %633 = vmatprep.subr.mxu0 0.0
    %634 = vmatpush1.msra.mxu0 0.0
    %635 = vmatprep.subr.mxu0 0.0
    %636 = vmatpush1.msra.mxu0 0.0
    %637 = vmatprep.subr.mxu0 0.0
    %638 = vmatpush1.msra.mxu0 0.0
    %639 = vmatprep.subr.mxu0 0.0
    %640 = vmatpush1.msra.mxu0 0.0
    %641 = vmatprep.subr.mxu0 0.0
    %642 = vmatpush1.msra.mxu0 0.0
    %643 = vmatprep.subr.mxu0 0.0
    %644 = vmatpush1.msra.mxu0 0.0
    %645 = vmatprep.subr.mxu0 0.0
    %646 = vmatpush1.msra.mxu0 0.0
    %647 = vmatprep.subr.mxu0 0.0
    %648 = vmatpush1.msra.mxu0 0.0
    %649 = vmatprep.subr.mxu0 0.0
    %650 = vmatpush1.msra.mxu0 0.0
    %651 = vmatprep.subr.mxu0 0.0
    %652 = vmatpush1.msra.mxu0 0.0
    %653 = vmatprep.subr.mxu0 0.0
    %654 = vmatpush1.msra.mxu0 0.0
    %655 = vmatprep.subr.mxu0 0.0
    %656 = vmatpush1.msra.mxu0 0.0
    %657 = vmatprep.subr.mxu0 0.0
    %658 = vmatpush1.msra.mxu0 0.0
    %659 = vmatprep.subr.mxu0 0.0
    %660 = vmatpush1.msra.mxu0 0.0
    %661 = vmatprep.subr.mxu0 0.0
    %662 = vmatpush1.msra.mxu0 0.0
    %663 = vmatprep.subr.mxu0 0.0
    %664 = vmatpush1.msra.mxu0 0.0
    %665 = vmatprep.subr.mxu0 0.0
    %666 = vmatpush1.msra.mxu0 0.0
    %667 = vmatprep.subr.mxu0 0.0
    %668 = vmatpush1.msra.mxu0 0.0
    %669 = vmatprep.subr.mxu0 0.0
    %670 = vmatpush1.msra.mxu0 0.0
    %671 = vmatprep.subr.mxu0 0.0
    %672 = vmatpush1.msra.mxu0 0.0
    %673 = vmatprep.subr.mxu0 0.0
    %674 = vmatpush1.msra.mxu0 0.0
    %675 = vmatprep.subr.mxu0 0.0
    %676 = vmatpush1.msra.mxu0 0.0
    %677 = vmatprep.mubr.f32.mxu0 0.0
    %678 = vmatmul.mubr.f32.gmra.mrb[0].mxu0 %v611
    %v679 = vpop.f32.mrb[0].mxu0
    %v680 = vadd.f32 0.0, %v679
    %v681 = vpop.f32.mrb[0].mxu0
    %682 = vdwg.mxu0
    %v684 = vrot.slane %v680, 2
    %v686 = vadd.f32 %v451, %v684
    %v687 = vtanh.pop %v686
    %v689 = vrot.slane %v357, 6
    %v691 = vsel %vm283, %v362, %v689
    %v693 = vrot.slane %v687, 6
    %v694 = vsel %vm373, %v693, 0
    %696 = vmatprep.subr.mxu0 0.0
    %697 = vmatpush1.msra.mxu0 %v365
    %698 = vmatprep.subr.mxu0 0.0
    %699 = vmatpush1.msra.mxu0 %v366
    %700 = vmatprep.subr.mxu0 0.0
    %701 = vmatpush1.msra.mxu0 %v367
    %702 = vmatprep.subr.mxu0 0.0
    %703 = vmatpush1.msra.mxu0 %v368
    %704 = vmatprep.subr.mxu0 0.0
    %705 = vmatpush1.msra.mxu0 0.0
    %706 = vmatprep.subr.mxu0 0.0
    %707 = vmatpush1.msra.mxu0 0.0
    %708 = vmatprep.subr.mxu0 0.0
    %709 = vmatpush1.msra.mxu0 0.0
    %710 = vmatprep.subr.mxu0 0.0
    %711 = vmatpush1.msra.mxu0 0.0
    %712 = vmatprep.subr.mxu0 0.0
    %713 = vmatpush1.msra.mxu0 0.0
    %714 = vmatprep.subr.mxu0 0.0
    %715 = vmatpush1.msra.mxu0 0.0
    %716 = vmatprep.subr.mxu0 0.0
    %717 = vmatpush1.msra.mxu0 0.0
    %718 = vmatprep.subr.mxu0 0.0
    %719 = vmatpush1.msra.mxu0 0.0
    %720 = vmatprep.subr.mxu0 0.0
    %721 = vmatpush1.msra.mxu0 0.0
    %722 = vmatprep.subr.mxu0 0.0
    %723 = vmatpush1.msra.mxu0 0.0
    %724 = vmatprep.subr.mxu0 0.0
    %725 = vmatpush1.msra.mxu0 0.0
    %726 = vmatprep.subr.mxu0 0.0
    %727 = vmatpush1.msra.mxu0 0.0
    %728 = vmatprep.subr.mxu0 0.0
    %729 = vmatpush1.msra.mxu0 0.0
    %730 = vmatprep.subr.mxu0 0.0
    %731 = vmatpush1.msra.mxu0 0.0
    %732 = vmatprep.subr.mxu0 0.0
    %733 = vmatpush1.msra.mxu0 0.0
    %734 = vmatprep.subr.mxu0 0.0
    %735 = vmatpush1.msra.mxu0 0.0
    %736 = vmatprep.subr.mxu0 0.0
    %737 = vmatpush1.msra.mxu0 0.0
    %738 = vmatprep.subr.mxu0 0.0
    %739 = vmatpush1.msra.mxu0 0.0
    %740 = vmatprep.subr.mxu0 0.0
    %741 = vmatpush1.msra.mxu0 0.0
    %742 = vmatprep.subr.mxu0 0.0
    %743 = vmatpush1.msra.mxu0 0.0
    %744 = vmatprep.subr.mxu0 0.0
    %745 = vmatpush1.msra.mxu0 0.0
    %746 = vmatprep.subr.mxu0 0.0
    %747 = vmatpush1.msra.mxu0 0.0
    %748 = vmatprep.subr.mxu0 0.0
    %749 = vmatpush1.msra.mxu0 0.0
    %750 = vmatprep.subr.mxu0 0.0
    %751 = vmatpush1.msra.mxu0 0.0
    %752 = vmatprep.subr.mxu0 0.0
    %753 = vmatpush1.msra.mxu0 0.0
    %754 = vmatprep.subr.mxu0 0.0
    %755 = vmatpush1.msra.mxu0 0.0
    %756 = vmatprep.subr.mxu0 0.0
    %757 = vmatpush1.msra.mxu0 0.0
    %758 = vmatprep.subr.mxu0 0.0
    %759 = vmatpush1.msra.mxu0 0.0
    %760 = vmatprep.mubr.f32.mxu0 0.0
    %761 = vmatmul.mubr.f32.gmra.mrb[0].mxu0 %v694
    %v762 = vpop.f32.mrb[0].mxu0
    %v763 = vadd.f32 0.0, %v762
    %v764 = vpop.f32.mrb[0].mxu0
    %765 = vdwg.mxu0
    %v766 = vadd.f32 %v691, %v763
    %v767 = vtanh.pop %v766
    %v768 = vrot.slane %v357, 2
    %v770 = vsel %vm283, %v362, %v768
    %v772 = vsel %vm373, %v767, 0
    %774 = vmatprep.subr.mxu0 0.0
    %775 = vmatpush1.msra.mxu0 %v365
    %776 = vmatprep.subr.mxu0 0.0
    %777 = vmatpush1.msra.mxu0 %v366
    %778 = vmatprep.subr.mxu0 0.0
    %779 = vmatpush1.msra.mxu0 %v367
    %780 = vmatprep.subr.mxu0 0.0
    %781 = vmatpush1.msra.mxu0 %v368
    %782 = vmatprep.subr.mxu0 0.0
    %783 = vmatpush1.msra.mxu0 0.0
    %784 = vmatprep.subr.mxu0 0.0
    %785 = vmatpush1.msra.mxu0 0.0
    %786 = vmatprep.subr.mxu0 0.0
    %787 = vmatpush1.msra.mxu0 0.0
    %788 = vmatprep.subr.mxu0 0.0
    %789 = vmatpush1.msra.mxu0 0.0
    %790 = vmatprep.subr.mxu0 0.0
    %791 = vmatpush1.msra.mxu0 0.0
    %792 = vmatprep.subr.mxu0 0.0
    %793 = vmatpush1.msra.mxu0 0.0
    %794 = vmatprep.subr.mxu0 0.0
    %795 = vmatpush1.msra.mxu0 0.0
    %796 = vmatprep.subr.mxu0 0.0
    %797 = vmatpush1.msra.mxu0 0.0
    %798 = vmatprep.subr.mxu0 0.0
    %799 = vmatpush1.msra.mxu0 0.0
    %800 = vmatprep.subr.mxu0 0.0
    %801 = vmatpush1.msra.mxu0 0.0
    %802 = vmatprep.subr.mxu0 0.0
    %803 = vmatpush1.msra.mxu0 0.0
    %804 = vmatprep.subr.mxu0 0.0
    %805 = vmatpush1.msra.mxu0 0.0
    %806 = vmatprep.subr.mxu0 0.0
    %807 = vmatpush1.msra.mxu0 0.0
    %808 = vmatprep.subr.mxu0 0.0
    %809 = vmatpush1.msra.mxu0 0.0
    %810 = vmatprep.subr.mxu0 0.0
    %811 = vmatpush1.msra.mxu0 0.0
    %812 = vmatprep.subr.mxu0 0.0
    %813 = vmatpush1.msra.mxu0 0.0
    %814 = vmatprep.subr.mxu0 0.0
    %815 = vmatpush1.msra.mxu0 0.0
    %816 = vmatprep.subr.mxu0 0.0
    %817 = vmatpush1.msra.mxu0 0.0
    %818 = vmatprep.subr.mxu0 0.0
    %819 = vmatpush1.msra.mxu0 0.0
    %820 = vmatprep.subr.mxu0 0.0
    %821 = vmatpush1.msra.mxu0 0.0
    %822 = vmatprep.subr.mxu0 0.0
    %823 = vmatpush1.msra.mxu0 0.0
    %824 = vmatprep.subr.mxu0 0.0
    %825 = vmatpush1.msra.mxu0 0.0
    %826 = vmatprep.subr.mxu0 0.0
    %827 = vmatpush1.msra.mxu0 0.0
    %828 = vmatprep.subr.mxu0 0.0
    %829 = vmatpush1.msra.mxu0 0.0
    %830 = vmatprep.subr.mxu0 0.0
    %831 = vmatpush1.msra.mxu0 0.0
    %832 = vmatprep.subr.mxu0 0.0
    %833 = vmatpush1.msra.mxu0 0.0
    %834 = vmatprep.subr.mxu0 0.0
    %835 = vmatpush1.msra.mxu0 0.0
    %836 = vmatprep.subr.mxu0 0.0
    %837 = vmatpush1.msra.mxu0 0.0
    %838 = vmatprep.mubr.f32.mxu0 0.0
    %839 = vmatmul.mubr.f32.gmra.mrb[0].mxu0 %v772
    %v840 = vpop.f32.mrb[0].mxu0
    %v841 = vadd.f32 0.0, %v840
    %v842 = vpop.f32.mrb[0].mxu0
    %843 = vdwg.mxu0
    %v845 = vrot.slane %v841, 6
    %v847 = vadd.f32 %v770, %v845
    %v848 = vtanh.pop %v847
    %v850 = vrot.slane %v848, 2
    %v851 = vsel %vm373, %v850, 0
    %853 = vmatprep.subr.mxu0 0.0
    %854 = vmatpush1.msra.mxu0 %v365
    %855 = vmatprep.subr.mxu0 0.0
    %856 = vmatpush1.msra.mxu0 %v366
    %857 = vmatprep.subr.mxu0 0.0
    %858 = vmatpush1.msra.mxu0 %v367
    %859 = vmatprep.subr.mxu0 0.0
    %860 = vmatpush1.msra.mxu0 %v368
    %861 = vmatprep.subr.mxu0 0.0
    %862 = vmatpush1.msra.mxu0 0.0
    %863 = vmatprep.subr.mxu0 0.0
    %864 = vmatpush1.msra.mxu0 0.0
    %865 = vmatprep.subr.mxu0 0.0
    %866 = vmatpush1.msra.mxu0 0.0
    %867 = vmatprep.subr.mxu0 0.0
    %868 = vmatpush1.msra.mxu0 0.0
    %869 = vmatprep.subr.mxu0 0.0
    %870 = vmatpush1.msra.mxu0 0.0
    %871 = vmatprep.subr.mxu0 0.0
    %872 = vmatpush1.msra.mxu0 0.0
    %873 = vmatprep.subr.mxu0 0.0
    %874 = vmatpush1.msra.mxu0 0.0
    %875 = vmatprep.subr.mxu0 0.0
    %876 = vmatpush1.msra.mxu0 0.0
    %877 = vmatprep.subr.mxu0 0.0
    %878 = vmatpush1.msra.mxu0 0.0
    %879 = vmatprep.subr.mxu0 0.0
    %880 = vmatpush1.msra.mxu0 0.0
    %881 = vmatprep.subr.mxu0 0.0
    %882 = vmatpush1.msra.mxu0 0.0
    %883 = vmatprep.subr.mxu0 0.0
    %884 = vmatpush1.msra.mxu0 0.0
    %885 = vmatprep.subr.mxu0 0.0
    %886 = vmatpush1.msra.mxu0 0.0
    %887 = vmatprep.subr.mxu0 0.0
    %888 = vmatpush1.msra.mxu0 0.0
    %889 = vmatprep.subr.mxu0 0.0
    %890 = vmatpush1.msra.mxu0 0.0
    %891 = vmatprep.subr.mxu0 0.0
    %892 = vmatpush1.msra.mxu0 0.0
    %893 = vmatprep.subr.mxu0 0.0
    %894 = vmatpush1.msra.mxu0 0.0
    %895 = vmatprep.subr.mxu0 0.0
    %896 = vmatpush1.msra.mxu0 0.0
    %897 = vmatprep.subr.mxu0 0.0
    %898 = vmatpush1.msra.mxu0 0.0
    %899 = vmatprep.subr.mxu0 0.0
    %900 = vmatpush1.msra.mxu0 0.0
    %901 = vmatprep.subr.mxu0 0.0
    %902 = vmatpush1.msra.mxu0 0.0
    %903 = vmatprep.subr.mxu0 0.0
    %904 = vmatpush1.msra.mxu0 0.0
    %905 = vmatprep.subr.mxu0 0.0
    %906 = vmatpush1.msra.mxu0 0.0
    %907 = vmatprep.subr.mxu0 0.0
    %908 = vmatpush1.msra.mxu0 0.0
    %909 = vmatprep.subr.mxu0 0.0
    %910 = vmatpush1.msra.mxu0 0.0
    %911 = vmatprep.subr.mxu0 0.0
    %912 = vmatpush1.msra.mxu0 0.0
    %913 = vmatprep.subr.mxu0 0.0
    %914 = vmatpush1.msra.mxu0 0.0
    %915 = vmatprep.subr.mxu0 0.0
    %916 = vmatpush1.msra.mxu0 0.0
    %917 = vmatprep.mubr.f32.mxu0 0.0
    %918 = vmatmul.mubr.f32.gmra.mrb[0].mxu0 %v851
    %v919 = vpop.f32.mrb[0].mxu0
    %v920 = vadd.f32 0.0, %v919
    %v921 = vpop.f32.mrb[0].mxu0
    %922 = vdwg.mxu0
    %v924 = vrot.slane %v920, 4
    %v926 = vadd.f32 %v691, %v924
    %v927 = vtanh.pop %v926
    %v929 = vrot.slane %v927, 4
    %v930 = vsel %vm373, %v929, 0
    %932 = vmatprep.subr.mxu0 0.0
    %933 = vmatpush1.msra.mxu0 %v365
    %934 = vmatprep.subr.mxu0 0.0
    %935 = vmatpush1.msra.mxu0 %v366
    %936 = vmatprep.subr.mxu0 0.0
    %937 = vmatpush1.msra.mxu0 %v367
    %938 = vmatprep.subr.mxu0 0.0
    %939 = vmatpush1.msra.mxu0 %v368
    %940 = vmatprep.subr.mxu0 0.0
    %941 = vmatpush1.msra.mxu0 0.0
    %942 = vmatprep.subr.mxu0 0.0
    %943 = vmatpush1.msra.mxu0 0.0
    %944 = vmatprep.subr.mxu0 0.0
    %945 = vmatpush1.msra.mxu0 0.0
    %946 = vmatprep.subr.mxu0 0.0
    %947 = vmatpush1.msra.mxu0 0.0
    %948 = vmatprep.subr.mxu0 0.0
    %949 = vmatpush1.msra.mxu0 0.0
    %950 = vmatprep.subr.mxu0 0.0
    %951 = vmatpush1.msra.mxu0 0.0
    %952 = vmatprep.subr.mxu0 0.0
    %953 = vmatpush1.msra.mxu0 0.0
    %954 = vmatprep.subr.mxu0 0.0
    %955 = vmatpush1.msra.mxu0 0.0
    %956 = vmatprep.subr.mxu0 0.0
    %957 = vmatpush1.msra.mxu0 0.0
    %958 = vmatprep.subr.mxu0 0.0
    %959 = vmatpush1.msra.mxu0 0.0
    %960 = vmatprep.subr.mxu0 0.0
    %961 = vmatpush1.msra.mxu0 0.0
    %962 = vmatprep.subr.mxu0 0.0
    %963 = vmatpush1.msra.mxu0 0.0
    %964 = vmatprep.subr.mxu0 0.0
    %965 = vmatpush1.msra.mxu0 0.0
    %966 = vmatprep.subr.mxu0 0.0
    %967 = vmatpush1.msra.mxu0 0.0
    %968 = vmatprep.subr.mxu0 0.0
    %969 = vmatpush1.msra.mxu0 0.0
    %970 = vmatprep.subr.mxu0 0.0
    %971 = vmatpush1.msra.mxu0 0.0
    %972 = vmatprep.subr.mxu0 0.0
    %973 = vmatpush1.msra.mxu0 0.0
    %974 = vmatprep.subr.mxu0 0.0
    %975 = vmatpush1.msra.mxu0 0.0
    %976 = vmatprep.subr.mxu0 0.0
    %977 = vmatpush1.msra.mxu0 0.0
    %978 = vmatprep.subr.mxu0 0.0
    %979 = vmatpush1.msra.mxu0 0.0
    %980 = vmatprep.subr.mxu0 0.0
    %981 = vmatpush1.msra.mxu0 0.0
    %982 = vmatprep.subr.mxu0 0.0
    %983 = vmatpush1.msra.mxu0 0.0
    %984 = vmatprep.subr.mxu0 0.0
    %985 = vmatpush1.msra.mxu0 0.0
    %986 = vmatprep.subr.mxu0 0.0
    %987 = vmatpush1.msra.mxu0 0.0
    %988 = vmatprep.subr.mxu0 0.0
    %989 = vmatpush1.msra.mxu0 0.0
    %990 = vmatprep.subr.mxu0 0.0
    %991 = vmatpush1.msra.mxu0 0.0
    %992 = vmatprep.subr.mxu0 0.0
    %993 = vmatpush1.msra.mxu0 0.0
    %994 = vmatprep.subr.mxu0 0.0
    %995 = vmatpush1.msra.mxu0 0.0
    %996 = vmatprep.mubr.f32.mxu0 0.0
    %997 = vmatmul.mubr.f32.gmra.mrb[0].mxu0 %v930
    %v998 = vpop.f32.mrb[0].mxu0
    %v999 = vadd.f32 0.0, %v998
    %v1000 = vpop.f32.mrb[0].mxu0
    %1001 = vdwg.mxu0
    %v1003 = vrot.slane %v999, 2
    %v1005 = vadd.f32 %v770, %v1003
    %v1006 = vtanh.pop %v1005
    %v1008 = vrot.slane %v1006, 6
    %v1010 = vsel %vm283, %v448, %v1008
    %v1011 = vrot.slane %v927, 2
    %v1013 = vsel %vm283, %v529, %v1011
    %v1014 = vrot.slane %v848, 6
    %v1016 = vsel %vm283, %v608, %v1014
    %v1017 = vrot.slane %v767, 2
    %v1019 = vsel %vm283, %v687, %v1017
    %v1021 = vsel %vm283, %v767, %v693
    %v1022 = vrot.slane %v608, 2
    %v1024 = vsel %vm283, %v848, %v1022
    %v1025 = vrot.slane %v529, 6
    %v1027 = vsel %vm283, %v927, %v1025
    %v1028 = vrot.slane %v448, 2
    %v1030 = vsel %vm283, %v1006, %v1028
    %v1031 = vsel %vm163, %v1010, %v1013
    %v1032 = vsel %vm167, %v1031, %v1016
    %v1033 = vsel %vm171, %v1032, %v1019
    %v1034 = vsel %vm163, %v1021, %v1024
    %v1035 = vsel %vm167, %v1034, %v1027
    %v1036 = vsel %vm171, %v1035, %v1030
    %v1037 = vld [vmem:[%s5] sm:$0xff]
    %v1038 = vld [vmem:[%s5 + $0x8] sm:$0xff]
    %v1039 = vld [vmem:[%s5 + $0x10] sm:$0xff]
    %v1040 = vld [vmem:[%s5 + $0x18] sm:$0xff]
    %v1041 = vld [vmem:[#allocation8] sm:$0x1]
    %v1043 = vlaneseq
    %v1044 = vshrl.u32 %v1043, 7
    %v1045 = vsub.s32 0, %v1044
    %v1046 = vrot.slane %v1041, %v1045
    %v1049 = vsel %vm373, %v1033, 0
    %v1052 = vsel %vm373, %v1036, 0
    %1054 = vmatprep.subr.mxu0 0.0
    %1055 = vmatpush1.msra.mxu0 %v1037
    %1056 = vmatprep.subr.mxu0 0.0
    %1057 = vmatpush1.msra.mxu0 %v1038
    %1058 = vmatprep.subr.mxu0 0.0
    %1059 = vmatpush1.msra.mxu0 %v1039
    %1060 = vmatprep.subr.mxu0 0.0
    %1061 = vmatpush1.msra.mxu0 %v1040
    %1062 = vmatprep.subr.mxu0 0.0
    %1063 = vmatpush1.msra.mxu0 0.0
    %1064 = vmatprep.subr.mxu0 0.0
    %1065 = vmatpush1.msra.mxu0 0.0
    %1066 = vmatprep.subr.mxu0 0.0
    %1067 = vmatpush1.msra.mxu0 0.0
    %1068 = vmatprep.subr.mxu0 0.0
    %1069 = vmatpush1.msra.mxu0 0.0
    %1070 = vmatprep.subr.mxu0 0.0
    %1071 = vmatpush1.msra.mxu0 0.0
    %1072 = vmatprep.subr.mxu0 0.0
    %1073 = vmatpush1.msra.mxu0 0.0
    %1074 = vmatprep.subr.mxu0 0.0
    %1075 = vmatpush1.msra.mxu0 0.0
    %1076 = vmatprep.subr.mxu0 0.0
    %1077 = vmatpush1.msra.mxu0 0.0
    %1078 = vmatprep.subr.mxu0 0.0
    %1079 = vmatpush1.msra.mxu0 0.0
    %1080 = vmatprep.subr.mxu0 0.0
    %1081 = vmatpush1.msra.mxu0 0.0
    %1082 = vmatprep.subr.mxu0 0.0
    %1083 = vmatpush1.msra.mxu0 0.0
    %1084 = vmatprep.subr.mxu0 0.0
    %1085 = vmatpush1.msra.mxu0 0.0
    %1086 = vmatprep.subr.mxu0 0.0
    %1087 = vmatpush1.msra.mxu0 0.0
    %1088 = vmatprep.subr.mxu0 0.0
    %1089 = vmatpush1.msra.mxu0 0.0
    %1090 = vmatprep.subr.mxu0 0.0
    %1091 = vmatpush1.msra.mxu0 0.0
    %1092 = vmatprep.subr.mxu0 0.0
    %1093 = vmatpush1.msra.mxu0 0.0
    %1094 = vmatprep.subr.mxu0 0.0
    %1095 = vmatpush1.msra.mxu0 0.0
    %1096 = vmatprep.subr.mxu0 0.0
    %1097 = vmatpush1.msra.mxu0 0.0
    %1098 = vmatprep.subr.mxu0 0.0
    %1099 = vmatpush1.msra.mxu0 0.0
    %1100 = vmatprep.subr.mxu0 0.0
    %1101 = vmatpush1.msra.mxu0 0.0
    %1102 = vmatprep.subr.mxu0 0.0
    %1103 = vmatpush1.msra.mxu0 0.0
    %1104 = vmatprep.subr.mxu0 0.0
    %1105 = vmatpush1.msra.mxu0 0.0
    %1106 = vmatprep.subr.mxu0 0.0
    %1107 = vmatpush1.msra.mxu0 0.0
    %1108 = vmatprep.subr.mxu0 0.0
    %1109 = vmatpush1.msra.mxu0 0.0
    %1110 = vmatprep.subr.mxu0 0.0
    %1111 = vmatpush1.msra.mxu0 0.0
    %1112 = vmatprep.subr.mxu0 0.0
    %1113 = vmatpush1.msra.mxu0 0.0
    %1114 = vmatprep.subr.mxu0 0.0
    %1115 = vmatpush1.msra.mxu0 0.0
    %1116 = vmatprep.subr.mxu0 0.0
    %1117 = vmatpush1.msra.mxu0 0.0
    %1118 = vmatprep.mubr.f32.mxu0 0.0
    %1119 = vmatmul.mubr.f32.gmra.mrb[0].mxu0 %v1049
    %v1120 = vpop.f32.mrb[0].mxu0
    %v1121 = vadd.f32 %v1046, %v1120
    %v1122 = vpop.f32.mrb[0].mxu0
    %1123 = vmatprep.mubr.f32.mxu0 0.0
    %1124 = vmatmul.mubr.f32.gmra.mrb[0].mxu0 %v1052
    %v1125 = vpop.f32.mrb[0].mxu0
    %v1126 = vadd.f32 %v1046, %v1125
    %v1127 = vpop.f32.mrb[0].mxu0
    %1128 = vdwg.mxu0
    %vm1129 = vcmask 785408
    %1130 = vst.msk [vmem:[#allocation2] sm:$0xff] %vm1129, %v1121
    %1131 = vst.msk [vmem:[#allocation2 + $0x8] sm:$0xff] %vm1129, %v1126
    %v1132 = vld [vmem:[#allocation2] ss:$2 sm:$0xff]
    %1134 = vrot.lane.b32.xlu0 %v1132, 96
    %v1135 = vpop.permute.xlu0 %1134
    %v1136 = vsel %vm373, %v1132, 0
    %v1138 = vsel %vm373, %v1135, 0
    %1140 = vmatprep.subr.mxu0 0.0
    %1141 = vmatpush1.xpose.msra.mxu0 %v1138
    %1142 = vmatprep.subr.mxu0 0.0
    %1143 = vmatpush1.xpose.msra.mxu0 0.0
    %1144 = vmatprep.subr.mxu0 0.0
    %1145 = vmatpush1.xpose.msra.mxu0 0.0
    %1146 = vmatprep.subr.mxu0 0.0
    %1147 = vmatpush1.xpose.msra.mxu0 0.0
    %1148 = vmatprep.subr.mxu0 0.0
    %1149 = vmatpush1.xpose.msra.mxu0 0.0
    %1150 = vmatprep.subr.mxu0 0.0
    %1151 = vmatpush1.xpose.msra.mxu0 0.0
    %1152 = vmatprep.subr.mxu0 0.0
    %1153 = vmatpush1.xpose.msra.mxu0 0.0
    %1154 = vmatprep.subr.mxu0 0.0
    %1155 = vmatpush1.xpose.msra.mxu0 0.0
    %1156 = vmatprep.subr.mxu0 0.0
    %1157 = vmatpush1.xpose.msra.mxu0 0.0
    %1158 = vmatprep.subr.mxu0 0.0
    %1159 = vmatpush1.xpose.msra.mxu0 0.0
    %1160 = vmatprep.subr.mxu0 0.0
    %1161 = vmatpush1.xpose.msra.mxu0 0.0
    %1162 = vmatprep.subr.mxu0 0.0
    %1163 = vmatpush1.xpose.msra.mxu0 0.0
    %1164 = vmatprep.subr.mxu0 0.0
    %1165 = vmatpush1.xpose.msra.mxu0 0.0
    %1166 = vmatprep.subr.mxu0 0.0
    %1167 = vmatpush1.xpose.msra.mxu0 0.0
    %1168 = vmatprep.subr.mxu0 0.0
    %1169 = vmatpush1.xpose.msra.mxu0 0.0
    %1170 = vmatprep.subr.mxu0 0.0
    %1171 = vmatpush1.xpose.msra.mxu0 0.0
    %1172 = vmatprep.subr.mxu0 0.0
    %1173 = vmatpush1.xpose.msra.mxu0 0.0
    %1174 = vmatprep.subr.mxu0 0.0
    %1175 = vmatpush1.xpose.msra.mxu0 0.0
    %1176 = vmatprep.subr.mxu0 0.0
    %1177 = vmatpush1.xpose.msra.mxu0 0.0
    %1178 = vmatprep.subr.mxu0 0.0
    %1179 = vmatpush1.xpose.msra.mxu0 0.0
    %1180 = vmatprep.subr.mxu0 0.0
    %1181 = vmatpush1.xpose.msra.mxu0 0.0
    %1182 = vmatprep.subr.mxu0 0.0
    %1183 = vmatpush1.xpose.msra.mxu0 0.0
    %1184 = vmatprep.subr.mxu0 0.0
    %1185 = vmatpush1.xpose.msra.mxu0 0.0
    %1186 = vmatprep.subr.mxu0 0.0
    %1187 = vmatpush1.xpose.msra.mxu0 0.0
    %1188 = vmatprep.subr.mxu0 0.0
    %1189 = vmatpush1.xpose.msra.mxu0 0.0
    %1190 = vmatprep.subr.mxu0 0.0
    %1191 = vmatpush1.xpose.msra.mxu0 0.0
    %1192 = vmatprep.subr.mxu0 0.0
    %1193 = vmatpush1.xpose.msra.mxu0 0.0
    %1194 = vmatprep.subr.mxu0 0.0
    %1195 = vmatpush1.xpose.msra.mxu0 0.0
    %1196 = vmatprep.subr.mxu0 0.0
    %1197 = vmatpush1.xpose.msra.mxu0 0.0
    %1198 = vmatprep.subr.mxu0 0.0
    %1199 = vmatpush1.xpose.msra.mxu0 0.0
    %1200 = vmatprep.subr.mxu0 0.0
    %1201 = vmatpush1.xpose.msra.mxu0 0.0
    %1202 = vmatprep.subr.mxu0 0.0
    %1203 = vmatpush1.xpose.msra.mxu0 0.0
    %1204 = vmatprep.mubr.f32.mxu0 0.0
    %1205 = vmatmul.mubr.f32.gmra.mrb[0].mxu0 %v1136
    %v1206 = vpop.f32.mrb[0].mxu0
    %v1207 = vadd.f32 0.0, %v1206
    %v1208 = vpop.f32.mrb[0].mxu0
    %1209 = vdwg.mxu0
    %v1210 = vmul.f32 %v1207, 0.17677669
    %vm1211 = vcmask 64512
    %v1212 = vsel %vm1211, %v1210, -inf
    %1213 = vmax.xlane.f32.xlu0 %v1212
    %v1214 = vpop.xlane.xlu0 %1213
    %v1215 = vsub.f32 %v1210, %v1214
    %v1216 = vmul.f32 %v1215, 1.442695
    %v1217 = vpow.pop %v1216
    %v1218 = vsel %vm1211, %v1217, 0.0
    %1219 = vadd.xlane.f32.xlu0 %v1218
    %v1220 = vpop.xlane.xlu0 %1219
    %v1221 = vrcp.pop %v1220
    %v1222 = vmul.f32 %v1217, %v1221
    %1223 = vrot.lane.b32.xlu0 %v1132, 64
    %v1224 = vpop.permute.xlu0 %1223
    %v1227 = vsel %vm1211, %v1222, 0
    %1229 = vmatprep.subr.mxu0 0.0
    %1230 = vmatpush1.msra.mxu0 %v1224
    %1231 = vmatprep.subr.mxu0 0.0
    %1232 = vmatpush1.msra.mxu0 0.0
    %1233 = vmatprep.subr.mxu0 0.0
    %1234 = vmatpush1.msra.mxu0 0.0
    %1235 = vmatprep.subr.mxu0 0.0
    %1236 = vmatpush1.msra.mxu0 0.0
    %1237 = vmatprep.subr.mxu0 0.0
    %1238 = vmatpush1.msra.mxu0 0.0
    %1239 = vmatprep.subr.mxu0 0.0
    %1240 = vmatpush1.msra.mxu0 0.0
    %1241 = vmatprep.subr.mxu0 0.0
    %1242 = vmatpush1.msra.mxu0 0.0
    %1243 = vmatprep.subr.mxu0 0.0
    %1244 = vmatpush1.msra.mxu0 0.0
    %1245 = vmatprep.subr.mxu0 0.0
    %1246 = vmatpush1.msra.mxu0 0.0
    %1247 = vmatprep.subr.mxu0 0.0
    %1248 = vmatpush1.msra.mxu0 0.0
    %1249 = vmatprep.subr.mxu0 0.0
    %1250 = vmatpush1.msra.mxu0 0.0
    %1251 = vmatprep.subr.mxu0 0.0
    %1252 = vmatpush1.msra.mxu0 0.0
    %1253 = vmatprep.subr.mxu0 0.0
    %1254 = vmatpush1.msra.mxu0 0.0
    %1255 = vmatprep.subr.mxu0 0.0
    %1256 = vmatpush1.msra.mxu0 0.0
    %1257 = vmatprep.subr.mxu0 0.0
    %1258 = vmatpush1.msra.mxu0 0.0
    %1259 = vmatprep.subr.mxu0 0.0
    %1260 = vmatpush1.msra.mxu0 0.0
    %1261 = vmatprep.subr.mxu0 0.0
    %1262 = vmatpush1.msra.mxu0 0.0
    %1263 = vmatprep.subr.mxu0 0.0
    %1264 = vmatpush1.msra.mxu0 0.0
    %1265 = vmatprep.subr.mxu0 0.0
    %1266 = vmatpush1.msra.mxu0 0.0
    %1267 = vmatprep.subr.mxu0 0.0
    %1268 = vmatpush1.msra.mxu0 0.0
    %1269 = vmatprep.subr.mxu0 0.0
    %1270 = vmatpush1.msra.mxu0 0.0
    %1271 = vmatprep.subr.mxu0 0.0
    %1272 = vmatpush1.msra.mxu0 0.0
    %1273 = vmatprep.subr.mxu0 0.0
    %1274 = vmatpush1.msra.mxu0 0.0
    %1275 = vmatprep.subr.mxu0 0.0
    %1276 = vmatpush1.msra.mxu0 0.0
    %1277 = vmatprep.subr.mxu0 0.0
    %1278 = vmatpush1.msra.mxu0 0.0
    %1279 = vmatprep.subr.mxu0 0.0
    %1280 = vmatpush1.msra.mxu0 0.0
    %1281 = vmatprep.subr.mxu0 0.0
    %1282 = vmatpush1.msra.mxu0 0.0
    %1283 = vmatprep.subr.mxu0 0.0
    %1284 = vmatpush1.msra.mxu0 0.0
    %1285 = vmatprep.subr.mxu0 0.0
    %1286 = vmatpush1.msra.mxu0 0.0
    %1287 = vmatprep.subr.mxu0 0.0
    %1288 = vmatpush1.msra.mxu0 0.0
    %1289 = vmatprep.subr.mxu0 0.0
    %1290 = vmatpush1.msra.mxu0 0.0
    %1291 = vmatprep.subr.mxu0 0.0
    %1292 = vmatpush1.msra.mxu0 0.0
    %1293 = vmatprep.mubr.f32.mxu0 0.0
    %1294 = vmatmul.mubr.f32.gmra.mrb[0].mxu0 %v1227
    %v1295 = vpop.f32.mrb[0].mxu0
    %v1296 = vadd.f32 0.0, %v1295
    %v1297 = vpop.f32.mrb[0].mxu0
    %1298 = vdwg.mxu0
    %v1299 = vsel %vm373, %v1296, 0.0
    %v1300 = vrot.slane %v1299, 4
    %v1301 = vadd.f32 %v1299, %v1300
    %v1302 = vrot.slane %v1301, 2
    %v1303 = vadd.f32 %v1301, %v1302
    %v1304 = vrot.slane %v1303, 1
    %v1305 = vadd.f32 %v1303, %v1304
    %v1306 = vmul.f32 %v1305, 0.125
    %s1307 = scalar_lea.vmem [#allocation2], 1
    %v1308 = vld [vmem:[%s1307] ss:$2 sm:$0xff]
    %1310 = vrot.lane.b32.xlu0 %v1308, 96
    %v1311 = vpop.permute.xlu0 %1310
    %v1312 = vsel %vm373, %v1308, 0
    %v1314 = vsel %vm373, %v1311, 0
    %1316 = vmatprep.subr.mxu0 0.0
    %1317 = vmatpush1.xpose.msra.mxu0 %v1314
    %1318 = vmatprep.subr.mxu0 0.0
    %1319 = vmatpush1.xpose.msra.mxu0 0.0
    %1320 = vmatprep.subr.mxu0 0.0
    %1321 = vmatpush1.xpose.msra.mxu0 0.0
    %1322 = vmatprep.subr.mxu0 0.0
    %1323 = vmatpush1.xpose.msra.mxu0 0.0
    %1324 = vmatprep.subr.mxu0 0.0
    %1325 = vmatpush1.xpose.msra.mxu0 0.0
    %1326 = vmatprep.subr.mxu0 0.0
    %1327 = vmatpush1.xpose.msra.mxu0 0.0
    %1328 = vmatprep.subr.mxu0 0.0
    %1329 = vmatpush1.xpose.msra.mxu0 0.0
    %1330 = vmatprep.subr.mxu0 0.0
    %1331 = vmatpush1.xpose.msra.mxu0 0.0
    %1332 = vmatprep.subr.mxu0 0.0
    %1333 = vmatpush1.xpose.msra.mxu0 0.0
    %1334 = vmatprep.subr.mxu0 0.0
    %1335 = vmatpush1.xpose.msra.mxu0 0.0
    %1336 = vmatprep.subr.mxu0 0.0
    %1337 = vmatpush1.xpose.msra.mxu0 0.0
    %1338 = vmatprep.subr.mxu0 0.0
    %1339 = vmatpush1.xpose.msra.mxu0 0.0
    %1340 = vmatprep.subr.mxu0 0.0
    %1341 = vmatpush1.xpose.msra.mxu0 0.0
    %1342 = vmatprep.subr.mxu0 0.0
    %1343 = vmatpush1.xpose.msra.mxu0 0.0
    %1344 = vmatprep.subr.mxu0 0.0
    %1345 = vmatpush1.xpose.msra.mxu0 0.0
    %1346 = vmatprep.subr.mxu0 0.0
    %1347 = vmatpush1.xpose.msra.mxu0 0.0
    %1348 = vmatprep.subr.mxu0 0.0
    %1349 = vmatpush1.xpose.msra.mxu0 0.0
    %1350 = vmatprep.subr.mxu0 0.0
    %1351 = vmatpush1.xpose.msra.mxu0 0.0
    %1352 = vmatprep.subr.mxu0 0.0
    %1353 = vmatpush1.xpose.msra.mxu0 0.0
    %1354 = vmatprep.subr.mxu0 0.0
    %1355 = vmatpush1.xpose.msra.mxu0 0.0
    %1356 = vmatprep.subr.mxu0 0.0
    %1357 = vmatpush1.xpose.msra.mxu0 0.0
    %1358 = vmatprep.subr.mxu0 0.0
    %1359 = vmatpush1.xpose.msra.mxu0 0.0
    %1360 = vmatprep.subr.mxu0 0.0
    %1361 = vmatpush1.xpose.msra.mxu0 0.0
    %1362 = vmatprep.subr.mxu0 0.0
    %1363 = vmatpush1.xpose.msra.mxu0 0.0
    %1364 = vmatprep.subr.mxu0 0.0
    %1365 = vmatpush1.xpose.msra.mxu0 0.0
    %1366 = vmatprep.subr.mxu0 0.0
    %1367 = vmatpush1.xpose.msra.mxu0 0.0
    %1368 = vmatprep.subr.mxu0 0.0
    %1369 = vmatpush1.xpose.msra.mxu0 0.0
    %1370 = vmatprep.subr.mxu0 0.0
    %1371 = vmatpush1.xpose.msra.mxu0 0.0
    %1372 = vmatprep.subr.mxu0 0.0
    %1373 = vmatpush1.xpose.msra.mxu0 0.0
    %1374 = vmatprep.subr.mxu0 0.0
    %1375 = vmatpush1.xpose.msra.mxu0 0.0
    %1376 = vmatprep.subr.mxu0 0.0
    %1377 = vmatpush1.xpose.msra.mxu0 0.0
    %1378 = vmatprep.subr.mxu0 0.0
    %1379 = vmatpush1.xpose.msra.mxu0 0.0
    %1380 = vmatprep.mubr.f32.mxu0 0.0
    %1381 = vmatmul.mubr.f32.gmra.mrb[0].mxu0 %v1312
    %v1382 = vpop.f32.mrb[0].mxu0
    %v1383 = vadd.f32 0.0, %v1382
    %v1384 = vpop.f32.mrb[0].mxu0
    %1385 = vdwg.mxu0
    %v1386 = vmul.f32 %v1383, 0.17677669
    %v1387 = vsel %vm1211, %v1386, -inf
    %1388 = vmax.xlane.f32.xlu0 %v1387
    %v1389 = vpop.xlane.xlu0 %1388
    %v1390 = vsub.f32 %v1386, %v1389
    %v1391 = vmul.f32 %v1390, 1.442695
    %v1392 = vpow.pop %v1391
    %v1393 = vsel %vm1211, %v1392, 0.0
    %1394 = vadd.xlane.f32.xlu0 %v1393
    %v1395 = vpop.xlane.xlu0 %1394
    %v1396 = vrcp.pop %v1395
    %v1397 = vmul.f32 %v1392, %v1396
    %1398 = vrot.lane.b32.xlu0 %v1308, 64
    %v1399 = vpop.permute.xlu0 %1398
    %v1402 = vsel %vm1211, %v1397, 0
    %1404 = vmatprep.subr.mxu0 0.0
    %1405 = vmatpush1.msra.mxu0 %v1399
    %1406 = vmatprep.subr.mxu0 0.0
    %1407 = vmatpush1.msra.mxu0 0.0
    %1408 = vmatprep.subr.mxu0 0.0
    %1409 = vmatpush1.msra.mxu0 0.0
    %1410 = vmatprep.subr.mxu0 0.0
    %1411 = vmatpush1.msra.mxu0 0.0
    %1412 = vmatprep.subr.mxu0 0.0
    %1413 = vmatpush1.msra.mxu0 0.0
    %1414 = vmatprep.subr.mxu0 0.0
    %1415 = vmatpush1.msra.mxu0 0.0
    %1416 = vmatprep.subr.mxu0 0.0
    %1417 = vmatpush1.msra.mxu0 0.0
    %1418 = vmatprep.subr.mxu0 0.0
    %1419 = vmatpush1.msra.mxu0 0.0
    %1420 = vmatprep.subr.mxu0 0.0
    %1421 = vmatpush1.msra.mxu0 0.0
    %1422 = vmatprep.subr.mxu0 0.0
    %1423 = vmatpush1.msra.mxu0 0.0
    %1424 = vmatprep.subr.mxu0 0.0
    %1425 = vmatpush1.msra.mxu0 0.0
    %1426 = vmatprep.subr.mxu0 0.0
    %1427 = vmatpush1.msra.mxu0 0.0
    %1428 = vmatprep.subr.mxu0 0.0
    %1429 = vmatpush1.msra.mxu0 0.0
    %1430 = vmatprep.subr.mxu0 0.0
    %1431 = vmatpush1.msra.mxu0 0.0
    %1432 = vmatprep.subr.mxu0 0.0
    %1433 = vmatpush1.msra.mxu0 0.0
    %1434 = vmatprep.subr.mxu0 0.0
    %1435 = vmatpush1.msra.mxu0 0.0
    %1436 = vmatprep.subr.mxu0 0.0
    %1437 = vmatpush1.msra.mxu0 0.0
    %1438 = vmatprep.subr.mxu0 0.0
    %1439 = vmatpush1.msra.mxu0 0.0
    %1440 = vmatprep.subr.mxu0 0.0
    %1441 = vmatpush1.msra.mxu0 0.0
    %1442 = vmatprep.subr.mxu0 0.0
    %1443 = vmatpush1.msra.mxu0 0.0
    %1444 = vmatprep.subr.mxu0 0.0
    %1445 = vmatpush1.msra.mxu0 0.0
    %1446 = vmatprep.subr.mxu0 0.0
    %1447 = vmatpush1.msra.mxu0 0.0
    %1448 = vmatprep.subr.mxu0 0.0
    %1449 = vmatpush1.msra.mxu0 0.0
    %1450 = vmatprep.subr.mxu0 0.0
    %1451 = vmatpush1.msra.mxu0 0.0
    %1452 = vmatprep.subr.mxu0 0.0
    %1453 = vmatpush1.msra.mxu0 0.0
    %1454 = vmatprep.subr.mxu0 0.0
    %1455 = vmatpush1.msra.mxu0 0.0
    %1456 = vmatprep.subr.mxu0 0.0
    %1457 = vmatpush1.msra.mxu0 0.0
    %1458 = vmatprep.subr.mxu0 0.0
    %1459 = vmatpush1.msra.mxu0 0.0
    %1460 = vmatprep.subr.mxu0 0.0
    %1461 = vmatpush1.msra.mxu0 0.0
    %1462 = vmatprep.subr.mxu0 0.0
    %1463 = vmatpush1.msra.mxu0 0.0
    %1464 = vmatprep.subr.mxu0 0.0
    %1465 = vmatpush1.msra.mxu0 0.0
    %1466 = vmatprep.subr.mxu0 0.0
    %1467 = vmatpush1.msra.mxu0 0.0
    %1468 = vmatprep.mubr.f32.mxu0 0.0
    %1469 = vmatmul.mubr.f32.gmra.mrb[0].mxu0 %v1402
    %v1470 = vpop.f32.mrb[0].mxu0
    %v1471 = vadd.f32 0.0, %v1470
    %v1472 = vpop.f32.mrb[0].mxu0
    %1473 = vdwg.mxu0
    %v1474 = vsel %vm373, %v1471, 0.0
    %v1475 = vrot.slane %v1474, 4
    %v1476 = vadd.f32 %v1474, %v1475
    %v1477 = vrot.slane %v1476, 2
    %v1478 = vadd.f32 %v1476, %v1477
    %v1479 = vrot.slane %v1478, 1
    %v1480 = vadd.f32 %v1478, %v1479
    %v1481 = vmul.f32 %v1480, 0.125
    %v1482 = vsel %vm161, %v1306, %v1481
    %v1483 = vld [vmem:[%s7] sm:$0xff]
    %v1484 = vld [vmem:[%s7 + $0x8] sm:$0xff]
    %v1485 = vld [vmem:[%s7 + $0x10] sm:$0xff]
    %v1486 = vld [vmem:[%s7 + $0x18] sm:$0xff]
    %v1487 = vld [vmem:[%s8] sm:$0x1]
    %v1489 = vlaneseq
    %v1490 = vshrl.u32 %v1489, 7
    %v1491 = vsub.s32 0, %v1490
    %v1492 = vrot.slane %v1487, %v1491
    %v1495 = vsel %vm373, %v1482, 0
    %1497 = vmatprep.subr.mxu0 0.0
    %1498 = vmatpush1.msra.mxu0 %v1483
    %1499 = vmatprep.subr.mxu0 0.0
    %1500 = vmatpush1.msra.mxu0 %v1484
    %1501 = vmatprep.subr.mxu0 0.0
    %1502 = vmatpush1.msra.mxu0 %v1485
    %1503 = vmatprep.subr.mxu0 0.0
    %1504 = vmatpush1.msra.mxu0 %v1486
    %1505 = vmatprep.subr.mxu0 0.0
    %1506 = vmatpush1.msra.mxu0 0.0
    %1507 = vmatprep.subr.mxu0 0.0
    %1508 = vmatpush1.msra.mxu0 0.0
    %1509 = vmatprep.subr.mxu0 0.0
    %1510 = vmatpush1.msra.mxu0 0.0
    %1511 = vmatprep.subr.mxu0 0.0
    %1512 = vmatpush1.msra.mxu0 0.0
    %1513 = vmatprep.subr.mxu0 0.0
    %1514 = vmatpush1.msra.mxu0 0.0
    %1515 = vmatprep.subr.mxu0 0.0
    %1516 = vmatpush1.msra.mxu0 0.0
    %1517 = vmatprep.subr.mxu0 0.0
    %1518 = vmatpush1.msra.mxu0 0.0
    %1519 = vmatprep.subr.mxu0 0.0
    %1520 = vmatpush1.msra.mxu0 0.0
    %1521 = vmatprep.subr.mxu0 0.0
    %1522 = vmatpush1.msra.mxu0 0.0
    %1523 = vmatprep.subr.mxu0 0.0
    %1524 = vmatpush1.msra.mxu0 0.0
    %1525 = vmatprep.subr.mxu0 0.0
    %1526 = vmatpush1.msra.mxu0 0.0
    %1527 = vmatprep.subr.mxu0 0.0
    %1528 = vmatpush1.msra.mxu0 0.0
    %1529 = vmatprep.subr.mxu0 0.0
    %1530 = vmatpush1.msra.mxu0 0.0
    %1531 = vmatprep.subr.mxu0 0.0
    %1532 = vmatpush1.msra.mxu0 0.0
    %1533 = vmatprep.subr.mxu0 0.0
    %1534 = vmatpush1.msra.mxu0 0.0
    %1535 = vmatprep.subr.mxu0 0.0
    %1536 = vmatpush1.msra.mxu0 0.0
    %1537 = vmatprep.subr.mxu0 0.0
    %1538 = vmatpush1.msra.mxu0 0.0
    %1539 = vmatprep.subr.mxu0 0.0
    %1540 = vmatpush1.msra.mxu0 0.0
    %1541 = vmatprep.subr.mxu0 0.0
    %1542 = vmatpush1.msra.mxu0 0.0
    %1543 = vmatprep.subr.mxu0 0.0
    %1544 = vmatpush1.msra.mxu0 0.0
    %1545 = vmatprep.subr.mxu0 0.0
    %1546 = vmatpush1.msra.mxu0 0.0
    %1547 = vmatprep.subr.mxu0 0.0
    %1548 = vmatpush1.msra.mxu0 0.0
    %1549 = vmatprep.subr.mxu0 0.0
    %1550 = vmatpush1.msra.mxu0 0.0
    %1551 = vmatprep.subr.mxu0 0.0
    %1552 = vmatpush1.msra.mxu0 0.0
    %1553 = vmatprep.subr.mxu0 0.0
    %1554 = vmatpush1.msra.mxu0 0.0
    %1555 = vmatprep.subr.mxu0 0.0
    %1556 = vmatpush1.msra.mxu0 0.0
    %1557 = vmatprep.subr.mxu0 0.0
    %1558 = vmatpush1.msra.mxu0 0.0
    %1559 = vmatprep.subr.mxu0 0.0
    %1560 = vmatpush1.msra.mxu0 0.0
    %1561 = vmatprep.mubr.f32.mxu0 0.0
    %1562 = vmatmul.mubr.f32.gmra.mrb[0].mxu0 %v1495
    %v1563 = vpop.f32.mrb[0].mxu0
    %v1564 = vadd.f32 %v1492, %v1563
    %v1565 = vpop.f32.mrb[0].mxu0
    %1566 = vdwg.mxu0
    %1567 = vst [vmem:[#allocation10] sm:$0x3] %v1564
    // Predicated region
    $region42: #{tpu_custom_call.1} parent=1 // pred_check
      _
    $region43: #{tpu_custom_call.1} parent=1 // pred_check_branch
      %1569 = sbr.rel (0) target = $region45
    $region44: #{tpu_custom_call.1} parent=1 // pred_region
      %s1571 = ssub.s32 32, 32
      %1572 = vsyncadd [#allocation7], %s1571
      %s1574 = sshll.u32 [#allocation10], 4
      %s1575 = int_to_ptr.vmem [resolvable:$true] %s1574
      %1577 = dma.vmem_to_hbm [thread:$0]  %s1575, 32, %s9, [#allocation7]
    $region45: #{tpu_custom_call.1} parent=1 // pred_fallthru
      _
    // Predicated region
    $region46: #{tpu_custom_call.1} parent=1 // pred_check
      _
    $region47: #{tpu_custom_call.1} parent=1 // pred_check_branch
      %1579 = sbr.rel (0) target = $region49
    $region48: #{tpu_custom_call.1} parent=1 // pred_region
      %1580 = dma.done [#allocation7], 32
    $region49: #{tpu_custom_call.1} parent=1 // pred_fallthru
      _
    %1581 = vsyncpa [#allocation6], 1
    %1582 = vsyncpa [#allocation9], 1
    %1583 = vsyncpa [#allocation7], 1

</llo_original>
